<compile_context>
chip_gen: v5e
topology: v5e:2x2
jax: 0.10.0
libtpu: 0.0.40
codegen_flags: <defaults>
</compile_context>

<pallas_src>
import functools

import jax
import jax.numpy as jnp
from jax import lax
from jax.experimental import pallas as pl
from jax.experimental.pallas import tpu as pltpu


def critic_kernel(x_ref, w1_ref, b1_ref, w2_ref, b2_ref, w3_ref, b3_ref, o_ref):
    """One batch tile of the 3-layer critic MLP, computed feature-major.

    x_ref : [Bt, D] f32   state tile in its natural [batch, feature] layout
    w1_ref: [F1, D] bf16  fc1 weight (PyTorch [out, in] layout)
    b1_ref: [F1, 1] bf16
    w2_ref: [F2, F1] bf16 fc2 weight
    b2_ref: [F2, 1] bf16
    w3_ref: [1,  F2] bf16 fc3 weight (256 -> 1) as a row
    b3_ref: [1,  1] f32
    o_ref : [1,  Bt] f32  lane-dense value row
    """
    # Cast the streamed input once in VMEM (avoids a separate XLA pass in HBM).
    x = x_ref[...].astype(jnp.bfloat16)                       # [Bt, D]

    # Layer 1: W1 @ x^T via dot_general contracting on D (trans_b matmul on
    # the MXU, f32 accumulation).  Result is feature-major [F1, Bt].
    h1 = lax.dot_general(w1_ref[...], x,
                         dimension_numbers=(((1,), (1,)), ((), ())),
                         preferred_element_type=jnp.float32)
    h1 = jnp.maximum(h1.astype(jnp.bfloat16) + b1_ref[...], 0)   # bf16 bias+ReLU

    # Layer 2.
    h2 = jnp.dot(w2_ref[...], h1, preferred_element_type=jnp.float32)
    h2 = jnp.maximum(h2.astype(jnp.bfloat16) + b2_ref[...], 0)

    # Layer 3 (256 -> 1) on the MXU: (1, F2) x (F2, Bt) -> (1, Bt), lane-dense.
    v = jnp.dot(w3_ref[...], h2, preferred_element_type=jnp.float32)
    o_ref[...] = (v + b3_ref[...]).astype(o_ref.dtype)


_BLOCK_B_CAP = 2048  # keeps f32 intermediates (~2x256*Bt*4 B) well under v7x VMEM


def _choose_block_b(batch):
    """Pick a lane-aligned batch tile: big enough to amortize per-step
    overhead, small enough to fit VMEM, and (for larger batches) yielding
    >= 2 grid steps so 'parallel' shards across v7x's 2 TensorCores."""
    b = -(-batch // 128) * 128          # lane-align
    if b <= 256:
        return b                        # launch-overhead bound; single tile
    half = -(-(b // 2) // 128) * 128    # round_up(b/2, 128) -> >= 2 tiles
    return max(256, min(_BLOCK_B_CAP, half))


def prepare_params(params):
    """One-time conversion of PyTorch-layout f32 params to kernel layout.

    Hoisted out of critic_forward so the casts/reshapes don't re-run on every
    forward call in a tight RL loop.
    """
    w1, b1, w2, b2, w3, b3 = params          # w: [out, in], b: [out]
    return (
        w1.astype(jnp.bfloat16),                         # [F1, D]
        b1.reshape(-1, 1).astype(jnp.bfloat16),          # [F1, 1]
        w2.astype(jnp.bfloat16),                         # [F2, F1]
        b2.reshape(-1, 1).astype(jnp.bfloat16),          # [F2, 1]
        w3.reshape(1, -1).astype(jnp.bfloat16),          # [1,  F2]
        b3.reshape(1, 1).astype(jnp.float32),            # [1,  1]
    )


@functools.partial(jax.jit, static_argnames=("block_b",))
def critic_forward(state, prepared_params, *, block_b=None):
    """state: [B, input_dims] f32; prepared_params from prepare_params().

    Returns value [B, 1] f32.
    """
    w1b, b1c, w2b, b2c, w3r, b3c = prepared_params
    B, D = state.shape
    F1 = w1b.shape[0]
    F2 = w2b.shape[0]

    if block_b is None:
        block_b = _choose_block_b(B)
    if block_b % 128 != 0:
        raise ValueError("block_b must be a multiple of 128")
    n_blocks = -(-B // block_b)          # ceil-div
    B_pad = n_blocks * block_b

    # Only pad when the batch is ragged (zero rows, sliced off below).
    x = state if B_pad == B else jnp.pad(state, ((0, B_pad - B), (0, 0)))

    flops = 2 * B_pad * (D * F1 + F1 * F2 + F2)
    bytes_accessed = (B_pad * D * 4 + (F1 * D + F2 * F1 + F2) * 2
                      + (F1 + F2) * 2 + 4 + B_pad * 4)

    # VMEM: double-buffered x/out tiles, resident bf16 weights, f32 matmul
    # accumulators and bf16 copies of x/h1/h2.
    vmem_est = (2 * block_b * D * 4
                + 2 * (F1 * D + F2 * F1) * 2
                + 2 * (F1 + F2 + F2 + 1) * 4
                + (F1 + F2) * block_b * 4
                + (block_b * D + (F1 + F2) * block_b) * 2
                + 2 * block_b * 4)
    vmem_limit = int(min(48 * 1024 * 1024, max(8 * 1024 * 1024, 2 * vmem_est)))

    out = pl.pallas_call(
        critic_kernel,
        out_shape=jax.ShapeDtypeStruct((1, B_pad), jnp.float32),
        grid_spec=pltpu.PrefetchScalarGridSpec(
            num_scalar_prefetch=0,
            grid=(n_blocks,),
            in_specs=[
                pl.BlockSpec((block_b, D), lambda i: (i, 0)),   # x tile (batch rows)
                pl.BlockSpec((F1, D), lambda i: (0, 0)),        # w1 (resident)
                pl.BlockSpec((F1, 1), lambda i: (0, 0)),        # b1
                pl.BlockSpec((F2, F1), lambda i: (0, 0)),       # w2 (resident)
                pl.BlockSpec((F2, 1), lambda i: (0, 0)),        # b2
                pl.BlockSpec((1, F2), lambda i: (0, 0)),        # w3 row
                pl.BlockSpec((1, 1), lambda i: (0, 0)),         # b3
            ],
            out_specs=pl.BlockSpec((1, block_b), lambda i: (0, i)),
        ),
        compiler_params=pltpu.CompilerParams(
            dimension_semantics=("parallel",),
            vmem_limit_bytes=vmem_limit,
        ),
        cost_estimate=pl.CostEstimate(
            flops=flops, transcendentals=0, bytes_accessed=bytes_accessed),
    )(x, w1b, b1c, w2b, b2c, w3r, b3c)

    return out[0, :B].reshape(B, 1)


def init_params(key, input_dims, fc1_dims=256, fc2_dims=256):
    """PyTorch nn.Linear default init (uniform +-1/sqrt(fan_in)), [out, in] layout."""
    def linear_init(k, fan_in, fan_out):
        kw, kb = jax.random.split(k)
        bound = 1.0 / jnp.sqrt(jnp.float32(fan_in))
        w = jax.random.uniform(kw, (fan_out, fan_in), jnp.float32, -bound, bound)
        b = jax.random.uniform(kb, (fan_out,), jnp.float32, -bound, bound)
        return w, b

    k1, k2, k3 = jax.random.split(key, 3)
    w1, b1 = linear_init(k1, input_dims, fc1_dims)
    w2, b2 = linear_init(k2, fc1_dims, fc2_dims)
    w3, b3 = linear_init(k3, fc2_dims, 1)
    return (w1, b1, w2, b2, w3, b3)


if __name__ == "__main__":
    key = jax.random.PRNGKey(0)
    k_params, k_state = jax.random.split(key)

    batch = 8
    input_dims = 32
    fc1_dims = 256
    fc2_dims = 256

    params = init_params(k_params, input_dims, fc1_dims, fc2_dims)
    prepared = prepare_params(params)
    state = jax.random.normal(k_state, (batch, input_dims), jnp.float32)

    value = critic_forward(state, prepared)
    value = jax.block_until_ready(value)
    assert value.shape == (batch, 1)

    # Pure-JAX reference with matching bf16 rounding points / f32 accumulation.
    w1, b1, w2, b2, w3, b3 = params
    xb = state.astype(jnp.bfloat16)
    h1 = jnp.dot(xb, w1.T.astype(jnp.bfloat16), preferred_element_type=jnp.float32)
    h1 = jnp.maximum(h1.astype(jnp.bfloat16) + b1.astype(jnp.bfloat16), 0)
    h2 = jnp.dot(h1, w2.T.astype(jnp.bfloat16), preferred_element_type=jnp.float32)
    h2 = jnp.maximum(h2.astype(jnp.bfloat16) + b2.astype(jnp.bfloat16), 0)
    ref = jnp.dot(h2, w3.T.astype(jnp.bfloat16),
                  preferred_element_type=jnp.float32) + b3

    assert jnp.allclose(value, ref, atol=2e-2, rtol=2e-2), \
        float(jnp.max(jnp.abs(value - ref)))

    print("KERNEL_OK")
</pallas_src>

<mosaic_0001>
module attributes {stable_mosaic.version = 11 : i64} {
  func.func @critic_kernel(%arg0: i32, %arg1: memref<128x32xf32, #tpu.memory_space<vmem>>, %arg2: memref<256x32xbf16, #tpu.memory_space<vmem>>, %arg3: memref<256x1xbf16, #tpu.memory_space<vmem>>, %arg4: memref<256x256xbf16, #tpu.memory_space<vmem>>, %arg5: memref<256x1xbf16, #tpu.memory_space<vmem>>, %arg6: memref<1x256xbf16, #tpu.memory_space<vmem>>, %arg7: memref<1x1xf32, #tpu.memory_space<vmem>>, %arg8: memref<1x128xf32, #tpu.memory_space<vmem>>) attributes {dimension_semantics = [#tpu.dimension_semantics<parallel>], iteration_bounds = array<i64: 1>, scalar_prefetch = 0 : i64, scratch_operands = 0 : i64, tpu.core_type = #tpu.core_type<tc>, window_params = [{transform_indices = @transform_0, window_bounds = array<i64: 128, 32>}, {pipeline_mode = #tpu.pipeline_mode<synchronous>, transform_indices = @transform_1, window_bounds = array<i64: 256, 32>}, {pipeline_mode = #tpu.pipeline_mode<synchronous>, transform_indices = @transform_2, window_bounds = array<i64: 256, 1>}, {pipeline_mode = #tpu.pipeline_mode<synchronous>, transform_indices = @transform_3, window_bounds = array<i64: 256, 256>}, {pipeline_mode = #tpu.pipeline_mode<synchronous>, transform_indices = @transform_4, window_bounds = array<i64: 256, 1>}, {pipeline_mode = #tpu.pipeline_mode<synchronous>, transform_indices = @transform_5, window_bounds = array<i64: 1, 256>}, {pipeline_mode = #tpu.pipeline_mode<synchronous>, transform_indices = @transform_6, window_bounds = array<i64: 1, 1>}, {transform_indices = @transform_7, window_bounds = array<i64: 1, 128>}]} {
    %c0 = arith.constant 0 : index
    %c0_0 = arith.constant 0 : index
    %0 = vector.load %arg1[%c0, %c0_0] : memref<128x32xf32, #tpu.memory_space<vmem>>, vector<128x32xf32>
    %1 = arith.truncf %0 : vector<128x32xf32> to vector<128x32xbf16>
    %c0_1 = arith.constant 0 : index
    %c0_2 = arith.constant 0 : index
    %2 = vector.load %arg2[%c0_1, %c0_2] : memref<256x32xbf16, #tpu.memory_space<vmem>>, vector<256x32xbf16>
    %cst = arith.constant dense<0.000000e+00> : vector<256x128xf32>
    %3 = tpu.matmul %2, %1, %cst {dimension_numbers = #tpu.dot_dimension_numbers<[1], [1], [0], [0], [0, 0, 1, 0], [], []>} : vector<256x32xbf16>, vector<128x32xbf16>, vector<256x128xf32> -> vector<256x128xf32>
    %4 = arith.truncf %3 : vector<256x128xf32> to vector<256x128xbf16>
    %c0_3 = arith.constant 0 : index
    %c0_4 = arith.constant 0 : index
    %5 = vector.load %arg3[%c0_3, %c0_4] : memref<256x1xbf16, #tpu.memory_space<vmem>>, vector<256x1xbf16>
    %6 = vector.broadcast %5 : vector<256x1xbf16> to vector<256x128xbf16>
    %7 = arith.addf %4, %6 : vector<256x128xbf16>
    %cst_5 = arith.constant 0.000000e+00 : bf16
    %8 = vector.broadcast %cst_5 : bf16 to vector<256x128xbf16>
    %9 = arith.maximumf %7, %8 : vector<256x128xbf16>
    %c0_6 = arith.constant 0 : index
    %c0_7 = arith.constant 0 : index
    %10 = vector.load %arg4[%c0_6, %c0_7] : memref<256x256xbf16, #tpu.memory_space<vmem>>, vector<256x256xbf16>
    %cst_8 = arith.constant dense<0.000000e+00> : vector<256x128xf32>
    %11 = tpu.matmul %10, %9, %cst_8 {dimension_numbers = #tpu.dot_dimension_numbers<[1], [0], [0], [1], [0, 0, 1, 1], [], []>} : vector<256x256xbf16>, vector<256x128xbf16>, vector<256x128xf32> -> vector<256x128xf32>
    %12 = arith.truncf %11 : vector<256x128xf32> to vector<256x128xbf16>
    %c0_9 = arith.constant 0 : index
    %c0_10 = arith.constant 0 : index
    %13 = vector.load %arg5[%c0_9, %c0_10] : memref<256x1xbf16, #tpu.memory_space<vmem>>, vector<256x1xbf16>
    %14 = vector.broadcast %13 : vector<256x1xbf16> to vector<256x128xbf16>
    %15 = arith.addf %12, %14 : vector<256x128xbf16>
    %cst_11 = arith.constant 0.000000e+00 : bf16
    %16 = vector.broadcast %cst_11 : bf16 to vector<256x128xbf16>
    %17 = arith.maximumf %15, %16 : vector<256x128xbf16>
    %c0_12 = arith.constant 0 : index
    %c0_13 = arith.constant 0 : index
    %18 = vector.load %arg6[%c0_12, %c0_13] : memref<1x256xbf16, #tpu.memory_space<vmem>>, vector<1x256xbf16>
    %cst_14 = arith.constant dense<0.000000e+00> : vector<1x128xf32>
    %19 = tpu.matmul %18, %17, %cst_14 {dimension_numbers = #tpu.dot_dimension_numbers<[1], [0], [0], [1], [0, 0, 1, 1], [], []>} : vector<1x256xbf16>, vector<256x128xbf16>, vector<1x128xf32> -> vector<1x128xf32>
    %c0_15 = arith.constant 0 : index
    %c0_16 = arith.constant 0 : index
    %20 = vector.load %arg7[%c0_15, %c0_16] : memref<1x1xf32, #tpu.memory_space<vmem>>, vector<1x1xf32>
    %21 = vector.broadcast %20 : vector<1x1xf32> to vector<1x128xf32>
    %22 = arith.addf %19, %21 : vector<1x128xf32>
    %c0_17 = arith.constant 0 : index
    %c0_18 = arith.constant 0 : index
    %23 = vector.load %arg8[%c0_17, %c0_18] : memref<1x128xf32, #tpu.memory_space<vmem>>, vector<1x128xf32>
    tpu.vector_store %arg8[%c0_17, %c0_18], %22 {strides = array<i32>} : memref<1x128xf32, #tpu.memory_space<vmem>>, vector<1x128xf32>,
    return
  }
  func.func @transform_0(%arg0: i32) -> (i32, i32) {
    %c0_i32 = arith.constant 0 : i32
    %c0_i32_0 = arith.constant 0 : i32
    return %arg0, %c0_i32 : i32, i32
  }
  func.func @transform_1(%arg0: i32) -> (i32, i32) {
    %c0_i32 = arith.constant 0 : i32
    %c0_i32_0 = arith.constant 0 : i32
    %c0_i32_1 = arith.constant 0 : i32
    return %c0_i32, %c0_i32_0 : i32, i32
  }
  func.func @transform_2(%arg0: i32) -> (i32, i32) {
    %c0_i32 = arith.constant 0 : i32
    %c0_i32_0 = arith.constant 0 : i32
    %c0_i32_1 = arith.constant 0 : i32
    return %c0_i32, %c0_i32_0 : i32, i32
  }
  func.func @transform_3(%arg0: i32) -> (i32, i32) {
    %c0_i32 = arith.constant 0 : i32
    %c0_i32_0 = arith.constant 0 : i32
    %c0_i32_1 = arith.constant 0 : i32
    return %c0_i32, %c0_i32_0 : i32, i32
  }
  func.func @transform_4(%arg0: i32) -> (i32, i32) {
    %c0_i32 = arith.constant 0 : i32
    %c0_i32_0 = arith.constant 0 : i32
    %c0_i32_1 = arith.constant 0 : i32
    return %c0_i32, %c0_i32_0 : i32, i32
  }
  func.func @transform_5(%arg0: i32) -> (i32, i32) {
    %c0_i32 = arith.constant 0 : i32
    %c0_i32_0 = arith.constant 0 : i32
    %c0_i32_1 = arith.constant 0 : i32
    return %c0_i32, %c0_i32_0 : i32, i32
  }
  func.func @transform_6(%arg0: i32) -> (i32, i32) {
    %c0_i32 = arith.constant 0 : i32
    %c0_i32_0 = arith.constant 0 : i32
    %c0_i32_1 = arith.constant 0 : i32
    return %c0_i32, %c0_i32_0 : i32, i32
  }
  func.func @transform_7(%arg0: i32) -> (i32, i32) {
    %c0_i32 = arith.constant 0 : i32
    %c0_i32_0 = arith.constant 0 : i32
    return %c0_i32, %arg0 : i32, i32
  }
}

</mosaic_0001>

<llo_original>
// kernel: critic_forward.1
$region0: #{critic_forward.1}
  #allocation0 [shape = 'u32[]', space=smem, size = 0x4, offset = 0x4, fixed_abs, tag = 'smem constant byte address 0x4 - core index']
  #allocation1 [shape = 'u32[72,128]{1,0:T(1,128)}', space=vmem, size = 0x9000, scoped, tag = 'internal scratch']
  #allocation2 [shape = 'f32[1,1]{1,0:T(1,128)S(1)}', space=vmem, size = 0x200, scoped, tag = 'scoped memory for critic_forward.1']
  %s0 = inlined_call_operand.vmem [shape: f32[128,32], index: 0, kind: input, shape index: {}]
  %s1 = inlined_call_operand.vmem [shape: bf16[256,32], index: 1, kind: input, shape index: {}]
  %s2 = inlined_call_operand.vmem [shape: bf16[256,1], index: 2, kind: input, shape index: {}]
  %s3 = inlined_call_operand.vmem [shape: bf16[256,256], index: 3, kind: input, shape index: {}]
  %s4 = inlined_call_operand.vmem [shape: bf16[256,1], index: 4, kind: input, shape index: {}]
  %s5 = inlined_call_operand.vmem [shape: bf16[1,256], index: 5, kind: input, shape index: {}]
  %s6 = inlined_call_operand.<no memory space> [shape: f32[1,1], index: 6, kind: input, shape index: {}]
  %s7 = inlined_call_operand.vmem [shape: f32[1,128], index: 7, kind: output, shape index: {}]
  %s8 = sld [smem:[#allocation0]]
  $region38: #{critic_forward.1} parent=0
    _
  %s10 = ssub.s32 1, %s8
  %s11 = scalar_select 0, %s10, %s8
  %v12 = vstv %s6
  %13 = vst [vmem:[#allocation2] sm:$0x1] %v12
  // Predicated region
  $region2: #{critic_forward.1} parent=0 // pred_check
    _
  $region3: #{critic_forward.1} parent=0 // pred_check_branch
    %15 = sbr.rel (0) target = $region5
  $region4: #{critic_forward.1} parent=0 // pred_region
    _
  $region5: #{critic_forward.1} parent=0 // pred_fallthru
    _
  // Predicated region
  $region6: #{critic_forward.1} parent=0 // pred_check
    _
  $region7: #{critic_forward.1} parent=0 // pred_check_branch
    %17 = sbr.rel (0) target = $region9
  $region8: #{critic_forward.1} parent=0 // pred_region
    _
  $region9: #{critic_forward.1} parent=0 // pred_fallthru
    _
  // Predicated region
  $region10: #{critic_forward.1} parent=0 // pred_check
    _
  $region11: #{critic_forward.1} parent=0 // pred_check_branch
    %19 = sbr.rel (0) target = $region13
  $region12: #{critic_forward.1} parent=0 // pred_region
    _
  $region13: #{critic_forward.1} parent=0 // pred_fallthru
    _
  // Predicated region
  $region14: #{critic_forward.1} parent=0 // pred_check
    _
  $region15: #{critic_forward.1} parent=0 // pred_check_branch
    %21 = sbr.rel (0) target = $region17
  $region16: #{critic_forward.1} parent=0 // pred_region
    _
  $region17: #{critic_forward.1} parent=0 // pred_fallthru
    _
  // Predicated region
  $region18: #{critic_forward.1} parent=0 // pred_check
    _
  $region19: #{critic_forward.1} parent=0 // pred_check_branch
    %23 = sbr.rel (0) target = $region21
  $region20: #{critic_forward.1} parent=0 // pred_region
    _
  $region21: #{critic_forward.1} parent=0 // pred_fallthru
    _
  // Predicated region
  $region22: #{critic_forward.1} parent=0 // pred_check
    _
  $region23: #{critic_forward.1} parent=0 // pred_check_branch
    %25 = sbr.rel (0) target = $region25
  $region24: #{critic_forward.1} parent=0 // pred_region
    _
  $region25: #{critic_forward.1} parent=0 // pred_fallthru
    _
  // Predicated region
  $region26: #{critic_forward.1} parent=0 // pred_check
    _
  $region27: #{critic_forward.1} parent=0 // pred_check_branch
    %27 = sbr.rel (0) target = $region29
  $region28: #{critic_forward.1} parent=0 // pred_region
    _
  $region29: #{critic_forward.1} parent=0 // pred_fallthru
    _
  %v28 = vld [vmem:[%s0] sm:$0xff]
  %v29 = vld [vmem:[%s0 + $0x8] sm:$0xff]
  %v30 = vld [vmem:[%s0 + $0x10] sm:$0xff]
  %v31 = vld [vmem:[%s0 + $0x18] sm:$0xff]
  %v32 = vld [vmem:[%s0 + $0x20] sm:$0xff]
  %v33 = vld [vmem:[%s0 + $0x28] sm:$0xff]
  %v34 = vld [vmem:[%s0 + $0x30] sm:$0xff]
  %v35 = vld [vmem:[%s0 + $0x38] sm:$0xff]
  %v36 = vld [vmem:[%s0 + $0x40] sm:$0xff]
  %v37 = vld [vmem:[%s0 + $0x48] sm:$0xff]
  %v38 = vld [vmem:[%s0 + $0x50] sm:$0xff]
  %v39 = vld [vmem:[%s0 + $0x58] sm:$0xff]
  %v40 = vld [vmem:[%s0 + $0x60] sm:$0xff]
  %v41 = vld [vmem:[%s0 + $0x68] sm:$0xff]
  %v42 = vld [vmem:[%s0 + $0x70] sm:$0xff]
  %v43 = vld [vmem:[%s0 + $0x78] sm:$0xff]
  %v44 = vpack.c.bf16 %v29, %v28
  %v45 = vpack.c.bf16 %v31, %v30
  %v46 = vpack.c.bf16 %v33, %v32
  %v47 = vpack.c.bf16 %v35, %v34
  %v48 = vpack.c.bf16 %v37, %v36
  %v49 = vpack.c.bf16 %v39, %v38
  %v50 = vpack.c.bf16 %v41, %v40
  %v51 = vpack.c.bf16 %v43, %v42
  %v52 = vld [vmem:[%s1] sm:$0xf]
  %v53 = vld [vmem:[%s1 + $0x4] sm:$0xf]
  %v54 = vld [vmem:[%s1 + $0x8] sm:$0xf]
  %v55 = vld [vmem:[%s1 + $0xc] sm:$0xf]
  %v56 = vld [vmem:[%s1 + $0x10] sm:$0xf]
  %v57 = vld [vmem:[%s1 + $0x14] sm:$0xf]
  %v58 = vld [vmem:[%s1 + $0x18] sm:$0xf]
  %v59 = vld [vmem:[%s1 + $0x1c] sm:$0xf]
  %v60 = vld [vmem:[%s1 + $0x20] sm:$0xf]
  %v61 = vld [vmem:[%s1 + $0x24] sm:$0xf]
  %v62 = vld [vmem:[%s1 + $0x28] sm:$0xf]
  %v63 = vld [vmem:[%s1 + $0x2c] sm:$0xf]
  %v64 = vld [vmem:[%s1 + $0x30] sm:$0xf]
  %v65 = vld [vmem:[%s1 + $0x34] sm:$0xf]
  %v66 = vld [vmem:[%s1 + $0x38] sm:$0xf]
  %v67 = vld [vmem:[%s1 + $0x3c] sm:$0xf]
  %v68 = vld [vmem:[%s1 + $0x40] sm:$0xf]
  %v69 = vld [vmem:[%s1 + $0x44] sm:$0xf]
  %v70 = vld [vmem:[%s1 + $0x48] sm:$0xf]
  %v71 = vld [vmem:[%s1 + $0x4c] sm:$0xf]
  %v72 = vld [vmem:[%s1 + $0x50] sm:$0xf]
  %v73 = vld [vmem:[%s1 + $0x54] sm:$0xf]
  %v74 = vld [vmem:[%s1 + $0x58] sm:$0xf]
  %v75 = vld [vmem:[%s1 + $0x5c] sm:$0xf]
  %v76 = vld [vmem:[%s1 + $0x60] sm:$0xf]
  %v77 = vld [vmem:[%s1 + $0x64] sm:$0xf]
  %v78 = vld [vmem:[%s1 + $0x68] sm:$0xf]
  %v79 = vld [vmem:[%s1 + $0x6c] sm:$0xf]
  %v80 = vld [vmem:[%s1 + $0x70] sm:$0xf]
  %v81 = vld [vmem:[%s1 + $0x74] sm:$0xf]
  %v82 = vld [vmem:[%s1 + $0x78] sm:$0xf]
  %v83 = vld [vmem:[%s1 + $0x7c] sm:$0xf]
  %v116 = vunpack.c.l.b16 %v52
  %v117 = vunpack.c.l.b16 %v53
  %v118 = vunpack.c.l.b16 %v54
  %v119 = vunpack.c.l.b16 %v55
  %v120 = vunpack.c.l.b16 %v56
  %v121 = vunpack.c.l.b16 %v57
  %v122 = vunpack.c.l.b16 %v58
  %v123 = vunpack.c.l.b16 %v59
  %v124 = vunpack.c.l.b16 %v60
  %v125 = vunpack.c.l.b16 %v61
  %v126 = vunpack.c.l.b16 %v62
  %v127 = vunpack.c.l.b16 %v63
  %v128 = vunpack.c.l.b16 %v64
  %v129 = vunpack.c.l.b16 %v65
  %v130 = vunpack.c.l.b16 %v66
  %v131 = vunpack.c.l.b16 %v67
  %v132 = vunpack.c.l.b16 %v68
  %v133 = vunpack.c.l.b16 %v69
  %v134 = vunpack.c.l.b16 %v70
  %v135 = vunpack.c.l.b16 %v71
  %v136 = vunpack.c.l.b16 %v72
  %v137 = vunpack.c.l.b16 %v73
  %v138 = vunpack.c.l.b16 %v74
  %v139 = vunpack.c.l.b16 %v75
  %v140 = vunpack.c.l.b16 %v76
  %v141 = vunpack.c.l.b16 %v77
  %v142 = vunpack.c.l.b16 %v78
  %v143 = vunpack.c.l.b16 %v79
  %v144 = vunpack.c.l.b16 %v80
  %v145 = vunpack.c.l.b16 %v81
  %v146 = vunpack.c.l.b16 %v82
  %v147 = vunpack.c.l.b16 %v83
  %v148 = vpack.c.b16 %v117, %v116
  %v149 = vpack.c.b16 %v119, %v118
  %v150 = vpack.c.b16 %v121, %v120
  %v151 = vpack.c.b16 %v123, %v122
  %v152 = vpack.c.b16 %v125, %v124
  %v153 = vpack.c.b16 %v127, %v126
  %v154 = vpack.c.b16 %v129, %v128
  %v155 = vpack.c.b16 %v131, %v130
  %v156 = vpack.c.b16 %v133, %v132
  %v157 = vpack.c.b16 %v135, %v134
  %v158 = vpack.c.b16 %v137, %v136
  %v159 = vpack.c.b16 %v139, %v138
  %v160 = vpack.c.b16 %v141, %v140
  %v161 = vpack.c.b16 %v143, %v142
  %v162 = vpack.c.b16 %v145, %v144
  %v163 = vpack.c.b16 %v147, %v146
  %vm164 = vcmask 261120
  %v166 = vsel %vm164, %v148, 0
  %v169 = vsel %vm164, %v149, 0
  %v172 = vsel %vm164, %v150, 0
  %v175 = vsel %vm164, %v151, 0
  %v178 = vsel %vm164, %v152, 0
  %v181 = vsel %vm164, %v153, 0
  %v184 = vsel %vm164, %v154, 0
  %v187 = vsel %vm164, %v155, 0
  %v190 = vsel %vm164, %v156, 0
  %v193 = vsel %vm164, %v157, 0
  %v196 = vsel %vm164, %v158, 0
  %v199 = vsel %vm164, %v159, 0
  %v202 = vsel %vm164, %v160, 0
  %v205 = vsel %vm164, %v161, 0
  %v208 = vsel %vm164, %v162, 0
  %v211 = vsel %vm164, %v163, 0
  %v214 = vsel %vm164, %v44, 0
  %v217 = vsel %vm164, %v45, 0
  %v220 = vsel %vm164, %v46, 0
  %v223 = vsel %vm164, %v47, 0
  %v226 = vsel %vm164, %v48, 0
  %v229 = vsel %vm164, %v49, 0
  %v232 = vsel %vm164, %v50, 0
  %v235 = vsel %vm164, %v51, 0
  %237 = vmatpush.bf16.xpose.msra.mxu0 %v235
  %238 = vmatpush.bf16.xpose.msra.mxu0 %v232
  %239 = vmatpush.bf16.xpose.msra.mxu0 %v229
  %240 = vmatpush.bf16.xpose.msra.mxu0 %v226
  %241 = vmatpush.bf16.xpose.msra.mxu0 %v223
  %242 = vmatpush.bf16.xpose.msra.mxu0 %v220
  %243 = vmatpush.bf16.xpose.msra.mxu0 %v217
  %244 = vmatpush.bf16.xpose.msra.mxu0 %v214
  %245 = vmatmul.bf16.gmra.mxu0 %v166
  %v246 = vpop.f32.mrf.mxu0
  %v247 = vadd.f32 0.0, %v246
  %v248 = vpop.f32.mrf.mxu0
  %v249 = vadd.f32 0.0, %v248
  %250 = vmatmul.bf16.gmra.mxu0 %v169
  %v251 = vpop.f32.mrf.mxu0
  %v252 = vadd.f32 0.0, %v251
  %v253 = vpop.f32.mrf.mxu0
  %v254 = vadd.f32 0.0, %v253
  %255 = vmatmul.bf16.gmra.mxu0 %v172
  %v256 = vpop.f32.mrf.mxu0
  %v257 = vadd.f32 0.0, %v256
  %v258 = vpop.f32.mrf.mxu0
  %v259 = vadd.f32 0.0, %v258
  %260 = vmatmul.bf16.gmra.mxu0 %v175
  %v261 = vpop.f32.mrf.mxu0
  %v262 = vadd.f32 0.0, %v261
  %v263 = vpop.f32.mrf.mxu0
  %v264 = vadd.f32 0.0, %v263
  %265 = vmatmul.bf16.gmra.mxu0 %v178
  %v266 = vpop.f32.mrf.mxu0
  %v267 = vadd.f32 0.0, %v266
  %v268 = vpop.f32.mrf.mxu0
  %v269 = vadd.f32 0.0, %v268
  %270 = vmatmul.bf16.gmra.mxu0 %v181
  %v271 = vpop.f32.mrf.mxu0
  %v272 = vadd.f32 0.0, %v271
  %v273 = vpop.f32.mrf.mxu0
  %v274 = vadd.f32 0.0, %v273
  %275 = vmatmul.bf16.gmra.mxu0 %v184
  %v276 = vpop.f32.mrf.mxu0
  %v277 = vadd.f32 0.0, %v276
  %v278 = vpop.f32.mrf.mxu0
  %v279 = vadd.f32 0.0, %v278
  %280 = vmatmul.bf16.gmra.mxu0 %v187
  %v281 = vpop.f32.mrf.mxu0
  %v282 = vadd.f32 0.0, %v281
  %v283 = vpop.f32.mrf.mxu0
  %v284 = vadd.f32 0.0, %v283
  %285 = vmatmul.bf16.gmra.mxu0 %v190
  %v286 = vpop.f32.mrf.mxu0
  %v287 = vadd.f32 0.0, %v286
  %v288 = vpop.f32.mrf.mxu0
  %v289 = vadd.f32 0.0, %v288
  %290 = vmatmul.bf16.gmra.mxu0 %v193
  %v291 = vpop.f32.mrf.mxu0
  %v292 = vadd.f32 0.0, %v291
  %v293 = vpop.f32.mrf.mxu0
  %v294 = vadd.f32 0.0, %v293
  %295 = vmatmul.bf16.gmra.mxu0 %v196
  %v296 = vpop.f32.mrf.mxu0
  %v297 = vadd.f32 0.0, %v296
  %v298 = vpop.f32.mrf.mxu0
  %v299 = vadd.f32 0.0, %v298
  %300 = vmatmul.bf16.gmra.mxu0 %v199
  %v301 = vpop.f32.mrf.mxu0
  %v302 = vadd.f32 0.0, %v301
  %v303 = vpop.f32.mrf.mxu0
  %v304 = vadd.f32 0.0, %v303
  %305 = vmatmul.bf16.gmra.mxu0 %v202
  %v306 = vpop.f32.mrf.mxu0
  %v307 = vadd.f32 0.0, %v306
  %v308 = vpop.f32.mrf.mxu0
  %v309 = vadd.f32 0.0, %v308
  %310 = vmatmul.bf16.gmra.mxu0 %v205
  %v311 = vpop.f32.mrf.mxu0
  %v312 = vadd.f32 0.0, %v311
  %v313 = vpop.f32.mrf.mxu0
  %v314 = vadd.f32 0.0, %v313
  %315 = vmatmul.bf16.gmra.mxu0 %v208
  %v316 = vpop.f32.mrf.mxu0
  %v317 = vadd.f32 0.0, %v316
  %v318 = vpop.f32.mrf.mxu0
  %v319 = vadd.f32 0.0, %v318
  %320 = vmatmul.bf16.gmra.mxu0 %v211
  %v321 = vpop.f32.mrf.mxu0
  %v322 = vadd.f32 0.0, %v321
  %v323 = vpop.f32.mrf.mxu0
  %v324 = vadd.f32 0.0, %v323
  %325 = vdwg.mxu0
  %v326 = vpack.c.bf16 %v247, %v247
  %v327 = vpack.c.bf16 %v249, %v249
  %v328 = vpack.c.bf16 %v252, %v252
  %v329 = vpack.c.bf16 %v254, %v254
  %v330 = vpack.c.bf16 %v257, %v257
  %v331 = vpack.c.bf16 %v259, %v259
  %v332 = vpack.c.bf16 %v262, %v262
  %v333 = vpack.c.bf16 %v264, %v264
  %v334 = vpack.c.bf16 %v267, %v267
  %v335 = vpack.c.bf16 %v269, %v269
  %v336 = vpack.c.bf16 %v272, %v272
  %v337 = vpack.c.bf16 %v274, %v274
  %v338 = vpack.c.bf16 %v277, %v277
  %v339 = vpack.c.bf16 %v279, %v279
  %v340 = vpack.c.bf16 %v282, %v282
  %v341 = vpack.c.bf16 %v284, %v284
  %v342 = vpack.c.bf16 %v287, %v287
  %v343 = vpack.c.bf16 %v289, %v289
  %v344 = vpack.c.bf16 %v292, %v292
  %v345 = vpack.c.bf16 %v294, %v294
  %v346 = vpack.c.bf16 %v297, %v297
  %v347 = vpack.c.bf16 %v299, %v299
  %v348 = vpack.c.bf16 %v302, %v302
  %v349 = vpack.c.bf16 %v304, %v304
  %v350 = vpack.c.bf16 %v307, %v307
  %v351 = vpack.c.bf16 %v309, %v309
  %v352 = vpack.c.bf16 %v312, %v312
  %v353 = vpack.c.bf16 %v314, %v314
  %v354 = vpack.c.bf16 %v317, %v317
  %v355 = vpack.c.bf16 %v319, %v319
  %v356 = vpack.c.bf16 %v322, %v322
  %v357 = vpack.c.bf16 %v324, %v324
  %v358 = vld [vmem:[%s2] sm:$0xf]
  %v359 = vld [vmem:[%s2 + $0x4] sm:$0xf]
  %v360 = vld [vmem:[%s2 + $0x8] sm:$0xf]
  %v361 = vld [vmem:[%s2 + $0xc] sm:$0xf]
  %v362 = vld [vmem:[%s2 + $0x10] sm:$0xf]
  %v363 = vld [vmem:[%s2 + $0x14] sm:$0xf]
  %v364 = vld [vmem:[%s2 + $0x18] sm:$0xf]
  %v365 = vld [vmem:[%s2 + $0x1c] sm:$0xf]
  %v366 = vld [vmem:[%s2 + $0x20] sm:$0xf]
  %v367 = vld [vmem:[%s2 + $0x24] sm:$0xf]
  %v368 = vld [vmem:[%s2 + $0x28] sm:$0xf]
  %v369 = vld [vmem:[%s2 + $0x2c] sm:$0xf]
  %v370 = vld [vmem:[%s2 + $0x30] sm:$0xf]
  %v371 = vld [vmem:[%s2 + $0x34] sm:$0xf]
  %v372 = vld [vmem:[%s2 + $0x38] sm:$0xf]
  %v373 = vld [vmem:[%s2 + $0x3c] sm:$0xf]
  %v374 = vld [vmem:[%s2 + $0x40] sm:$0xf]
  %v375 = vld [vmem:[%s2 + $0x44] sm:$0xf]
  %v376 = vld [vmem:[%s2 + $0x48] sm:$0xf]
  %v377 = vld [vmem:[%s2 + $0x4c] sm:$0xf]
  %v378 = vld [vmem:[%s2 + $0x50] sm:$0xf]
  %v379 = vld [vmem:[%s2 + $0x54] sm:$0xf]
  %v380 = vld [vmem:[%s2 + $0x58] sm:$0xf]
  %v381 = vld [vmem:[%s2 + $0x5c] sm:$0xf]
  %v382 = vld [vmem:[%s2 + $0x60] sm:$0xf]
  %v383 = vld [vmem:[%s2 + $0x64] sm:$0xf]
  %v384 = vld [vmem:[%s2 + $0x68] sm:$0xf]
  %v385 = vld [vmem:[%s2 + $0x6c] sm:$0xf]
  %v386 = vld [vmem:[%s2 + $0x70] sm:$0xf]
  %v387 = vld [vmem:[%s2 + $0x74] sm:$0xf]
  %v388 = vld [vmem:[%s2 + $0x78] sm:$0xf]
  %v389 = vld [vmem:[%s2 + $0x7c] sm:$0xf]
  %391 = vset.pattern.permute.xlu0 0
  %392 = vperm.xlu0 %391, %v358
  %v393 = vpop.permute.xlu0 %392
  %v396 = vunpack.c.l.s4 839922192
  %v397 = vunpack.c.0.s8 %v396
  %v398 = vperm.slane %v393, %v397
  %400 = vset.pattern.permute.xlu0 0
  %401 = vperm.xlu0 %400, %v359
  %v402 = vpop.permute.xlu0 %401
  %v405 = vunpack.c.l.s4 839922192
  %v406 = vunpack.c.0.s8 %v405
  %v407 = vperm.slane %v402, %v406
  %409 = vset.pattern.permute.xlu0 0
  %410 = vperm.xlu0 %409, %v360
  %v411 = vpop.permute.xlu0 %410
  %v414 = vunpack.c.l.s4 839922192
  %v415 = vunpack.c.0.s8 %v414
  %v416 = vperm.slane %v411, %v415
  %418 = vset.pattern.permute.xlu0 0
  %419 = vperm.xlu0 %418, %v361
  %v420 = vpop.permute.xlu0 %419
  %v423 = vunpack.c.l.s4 839922192
  %v424 = vunpack.c.0.s8 %v423
  %v425 = vperm.slane %v420, %v424
  %427 = vset.pattern.permute.xlu0 0
  %428 = vperm.xlu0 %427, %v362
  %v429 = vpop.permute.xlu0 %428
  %v432 = vunpack.c.l.s4 839922192
  %v433 = vunpack.c.0.s8 %v432
  %v434 = vperm.slane %v429, %v433
  %436 = vset.pattern.permute.xlu0 0
  %437 = vperm.xlu0 %436, %v363
  %v438 = vpop.permute.xlu0 %437
  %v441 = vunpack.c.l.s4 839922192
  %v442 = vunpack.c.0.s8 %v441
  %v443 = vperm.slane %v438, %v442
  %445 = vset.pattern.permute.xlu0 0
  %446 = vperm.xlu0 %445, %v364
  %v447 = vpop.permute.xlu0 %446
  %v450 = vunpack.c.l.s4 839922192
  %v451 = vunpack.c.0.s8 %v450
  %v452 = vperm.slane %v447, %v451
  %454 = vset.pattern.permute.xlu0 0
  %455 = vperm.xlu0 %454, %v365
  %v456 = vpop.permute.xlu0 %455
  %v459 = vunpack.c.l.s4 839922192
  %v460 = vunpack.c.0.s8 %v459
  %v461 = vperm.slane %v456, %v460
  %463 = vset.pattern.permute.xlu0 0
  %464 = vperm.xlu0 %463, %v366
  %v465 = vpop.permute.xlu0 %464
  %v468 = vunpack.c.l.s4 839922192
  %v469 = vunpack.c.0.s8 %v468
  %v470 = vperm.slane %v465, %v469
  %472 = vset.pattern.permute.xlu0 0
  %473 = vperm.xlu0 %472, %v367
  %v474 = vpop.permute.xlu0 %473
  %v477 = vunpack.c.l.s4 839922192
  %v478 = vunpack.c.0.s8 %v477
  %v479 = vperm.slane %v474, %v478
  %481 = vset.pattern.permute.xlu0 0
  %482 = vperm.xlu0 %481, %v368
  %v483 = vpop.permute.xlu0 %482
  %v486 = vunpack.c.l.s4 839922192
  %v487 = vunpack.c.0.s8 %v486
  %v488 = vperm.slane %v483, %v487
  %490 = vset.pattern.permute.xlu0 0
  %491 = vperm.xlu0 %490, %v369
  %v492 = vpop.permute.xlu0 %491
  %v495 = vunpack.c.l.s4 839922192
  %v496 = vunpack.c.0.s8 %v495
  %v497 = vperm.slane %v492, %v496
  %499 = vset.pattern.permute.xlu0 0
  %500 = vperm.xlu0 %499, %v370
  %v501 = vpop.permute.xlu0 %500
  %v504 = vunpack.c.l.s4 839922192
  %v505 = vunpack.c.0.s8 %v504
  %v506 = vperm.slane %v501, %v505
  %508 = vset.pattern.permute.xlu0 0
  %509 = vperm.xlu0 %508, %v371
  %v510 = vpop.permute.xlu0 %509
  %v513 = vunpack.c.l.s4 839922192
  %v514 = vunpack.c.0.s8 %v513
  %v515 = vperm.slane %v510, %v514
  %517 = vset.pattern.permute.xlu0 0
  %518 = vperm.xlu0 %517, %v372
  %v519 = vpop.permute.xlu0 %518
  %v522 = vunpack.c.l.s4 839922192
  %v523 = vunpack.c.0.s8 %v522
  %v524 = vperm.slane %v519, %v523
  %526 = vset.pattern.permute.xlu0 0
  %527 = vperm.xlu0 %526, %v373
  %v528 = vpop.permute.xlu0 %527
  %v531 = vunpack.c.l.s4 839922192
  %v532 = vunpack.c.0.s8 %v531
  %v533 = vperm.slane %v528, %v532
  %535 = vset.pattern.permute.xlu0 0
  %536 = vperm.xlu0 %535, %v374
  %v537 = vpop.permute.xlu0 %536
  %v540 = vunpack.c.l.s4 839922192
  %v541 = vunpack.c.0.s8 %v540
  %v542 = vperm.slane %v537, %v541
  %544 = vset.pattern.permute.xlu0 0
  %545 = vperm.xlu0 %544, %v375
  %v546 = vpop.permute.xlu0 %545
  %v549 = vunpack.c.l.s4 839922192
  %v550 = vunpack.c.0.s8 %v549
  %v551 = vperm.slane %v546, %v550
  %553 = vset.pattern.permute.xlu0 0
  %554 = vperm.xlu0 %553, %v376
  %v555 = vpop.permute.xlu0 %554
  %v558 = vunpack.c.l.s4 839922192
  %v559 = vunpack.c.0.s8 %v558
  %v560 = vperm.slane %v555, %v559
  %562 = vset.pattern.permute.xlu0 0
  %563 = vperm.xlu0 %562, %v377
  %v564 = vpop.permute.xlu0 %563
  %v567 = vunpack.c.l.s4 839922192
  %v568 = vunpack.c.0.s8 %v567
  %v569 = vperm.slane %v564, %v568
  %571 = vset.pattern.permute.xlu0 0
  %572 = vperm.xlu0 %571, %v378
  %v573 = vpop.permute.xlu0 %572
  %v576 = vunpack.c.l.s4 839922192
  %v577 = vunpack.c.0.s8 %v576
  %v578 = vperm.slane %v573, %v577
  %580 = vset.pattern.permute.xlu0 0
  %581 = vperm.xlu0 %580, %v379
  %v582 = vpop.permute.xlu0 %581
  %v585 = vunpack.c.l.s4 839922192
  %v586 = vunpack.c.0.s8 %v585
  %v587 = vperm.slane %v582, %v586
  %589 = vset.pattern.permute.xlu0 0
  %590 = vperm.xlu0 %589, %v380
  %v591 = vpop.permute.xlu0 %590
  %v594 = vunpack.c.l.s4 839922192
  %v595 = vunpack.c.0.s8 %v594
  %v596 = vperm.slane %v591, %v595
  %598 = vset.pattern.permute.xlu0 0
  %599 = vperm.xlu0 %598, %v381
  %v600 = vpop.permute.xlu0 %599
  %v603 = vunpack.c.l.s4 839922192
  %v604 = vunpack.c.0.s8 %v603
  %v605 = vperm.slane %v600, %v604
  %607 = vset.pattern.permute.xlu0 0
  %608 = vperm.xlu0 %607, %v382
  %v609 = vpop.permute.xlu0 %608
  %v612 = vunpack.c.l.s4 839922192
  %v613 = vunpack.c.0.s8 %v612
  %v614 = vperm.slane %v609, %v613
  %616 = vset.pattern.permute.xlu0 0
  %617 = vperm.xlu0 %616, %v383
  %v618 = vpop.permute.xlu0 %617
  %v621 = vunpack.c.l.s4 839922192
  %v622 = vunpack.c.0.s8 %v621
  %v623 = vperm.slane %v618, %v622
  %625 = vset.pattern.permute.xlu0 0
  %626 = vperm.xlu0 %625, %v384
  %v627 = vpop.permute.xlu0 %626
  %v630 = vunpack.c.l.s4 839922192
  %v631 = vunpack.c.0.s8 %v630
  %v632 = vperm.slane %v627, %v631
  %634 = vset.pattern.permute.xlu0 0
  %635 = vperm.xlu0 %634, %v385
  %v636 = vpop.permute.xlu0 %635
  %v639 = vunpack.c.l.s4 839922192
  %v640 = vunpack.c.0.s8 %v639
  %v641 = vperm.slane %v636, %v640
  %643 = vset.pattern.permute.xlu0 0
  %644 = vperm.xlu0 %643, %v386
  %v645 = vpop.permute.xlu0 %644
  %v648 = vunpack.c.l.s4 839922192
  %v649 = vunpack.c.0.s8 %v648
  %v650 = vperm.slane %v645, %v649
  %652 = vset.pattern.permute.xlu0 0
  %653 = vperm.xlu0 %652, %v387
  %v654 = vpop.permute.xlu0 %653
  %v657 = vunpack.c.l.s4 839922192
  %v658 = vunpack.c.0.s8 %v657
  %v659 = vperm.slane %v654, %v658
  %661 = vset.pattern.permute.xlu0 0
  %662 = vperm.xlu0 %661, %v388
  %v663 = vpop.permute.xlu0 %662
  %v666 = vunpack.c.l.s4 839922192
  %v667 = vunpack.c.0.s8 %v666
  %v668 = vperm.slane %v663, %v667
  %670 = vset.pattern.permute.xlu0 0
  %671 = vperm.xlu0 %670, %v389
  %v672 = vpop.permute.xlu0 %671
  %v675 = vunpack.c.l.s4 839922192
  %v676 = vunpack.c.0.s8 %v675
  %v677 = vperm.slane %v672, %v676
  %v678 = vunpack.c.l.bf16 %v326
  %v679 = vunpack.c.l.bf16 %v327
  %v680 = vunpack.c.l.bf16 %v328
  %v681 = vunpack.c.l.bf16 %v329
  %v682 = vunpack.c.l.bf16 %v330
  %v683 = vunpack.c.l.bf16 %v331
  %v684 = vunpack.c.l.bf16 %v332
  %v685 = vunpack.c.l.bf16 %v333
  %v686 = vunpack.c.l.bf16 %v334
  %v687 = vunpack.c.l.bf16 %v335
  %v688 = vunpack.c.l.bf16 %v336
  %v689 = vunpack.c.l.bf16 %v337
  %v690 = vunpack.c.l.bf16 %v338
  %v691 = vunpack.c.l.bf16 %v339
  %v692 = vunpack.c.l.bf16 %v340
  %v693 = vunpack.c.l.bf16 %v341
  %v694 = vunpack.c.l.bf16 %v342
  %v695 = vunpack.c.l.bf16 %v343
  %v696 = vunpack.c.l.bf16 %v344
  %v697 = vunpack.c.l.bf16 %v345
  %v698 = vunpack.c.l.bf16 %v346
  %v699 = vunpack.c.l.bf16 %v347
  %v700 = vunpack.c.l.bf16 %v348
  %v701 = vunpack.c.l.bf16 %v349
  %v702 = vunpack.c.l.bf16 %v350
  %v703 = vunpack.c.l.bf16 %v351
  %v704 = vunpack.c.l.bf16 %v352
  %v705 = vunpack.c.l.bf16 %v353
  %v706 = vunpack.c.l.bf16 %v354
  %v707 = vunpack.c.l.bf16 %v355
  %v708 = vunpack.c.l.bf16 %v356
  %v709 = vunpack.c.l.bf16 %v357
  %v710 = vunpack.c.l.bf16 %v398
  %v711 = vunpack.c.l.bf16 %v407
  %v712 = vunpack.c.l.bf16 %v416
  %v713 = vunpack.c.l.bf16 %v425
  %v714 = vunpack.c.l.bf16 %v434
  %v715 = vunpack.c.l.bf16 %v443
  %v716 = vunpack.c.l.bf16 %v452
  %v717 = vunpack.c.l.bf16 %v461
  %v718 = vunpack.c.l.bf16 %v470
  %v719 = vunpack.c.l.bf16 %v479
  %v720 = vunpack.c.l.bf16 %v488
  %v721 = vunpack.c.l.bf16 %v497
  %v722 = vunpack.c.l.bf16 %v506
  %v723 = vunpack.c.l.bf16 %v515
  %v724 = vunpack.c.l.bf16 %v524
  %v725 = vunpack.c.l.bf16 %v533
  %v726 = vunpack.c.l.bf16 %v542
  %v727 = vunpack.c.l.bf16 %v551
  %v728 = vunpack.c.l.bf16 %v560
  %v729 = vunpack.c.l.bf16 %v569
  %v730 = vunpack.c.l.bf16 %v578
  %v731 = vunpack.c.l.bf16 %v587
  %v732 = vunpack.c.l.bf16 %v596
  %v733 = vunpack.c.l.bf16 %v605
  %v734 = vunpack.c.l.bf16 %v614
  %v735 = vunpack.c.l.bf16 %v623
  %v736 = vunpack.c.l.bf16 %v632
  %v737 = vunpack.c.l.bf16 %v641
  %v738 = vunpack.c.l.bf16 %v650
  %v739 = vunpack.c.l.bf16 %v659
  %v740 = vunpack.c.l.bf16 %v668
  %v741 = vunpack.c.l.bf16 %v677
  %v742 = vadd.f32 %v678, %v710
  %v743 = vadd.f32 %v679, %v711
  %v744 = vadd.f32 %v680, %v712
  %v745 = vadd.f32 %v681, %v713
  %v746 = vadd.f32 %v682, %v714
  %v747 = vadd.f32 %v683, %v715
  %v748 = vadd.f32 %v684, %v716
  %v749 = vadd.f32 %v685, %v717
  %v750 = vadd.f32 %v686, %v718
  %v751 = vadd.f32 %v687, %v719
  %v752 = vadd.f32 %v688, %v720
  %v753 = vadd.f32 %v689, %v721
  %v754 = vadd.f32 %v690, %v722
  %v755 = vadd.f32 %v691, %v723
  %v756 = vadd.f32 %v692, %v724
  %v757 = vadd.f32 %v693, %v725
  %v758 = vadd.f32 %v694, %v726
  %v759 = vadd.f32 %v695, %v727
  %v760 = vadd.f32 %v696, %v728
  %v761 = vadd.f32 %v697, %v729
  %v762 = vadd.f32 %v698, %v730
  %v763 = vadd.f32 %v699, %v731
  %v764 = vadd.f32 %v700, %v732
  %v765 = vadd.f32 %v701, %v733
  %v766 = vadd.f32 %v702, %v734
  %v767 = vadd.f32 %v703, %v735
  %v768 = vadd.f32 %v704, %v736
  %v769 = vadd.f32 %v705, %v737
  %v770 = vadd.f32 %v706, %v738
  %v771 = vadd.f32 %v707, %v739
  %v772 = vadd.f32 %v708, %v740
  %v773 = vadd.f32 %v709, %v741
  %v774 = vpack.c.bf16 %v742, %v742
  %v775 = vpack.c.bf16 %v743, %v743
  %v776 = vpack.c.bf16 %v744, %v744
  %v777 = vpack.c.bf16 %v745, %v745
  %v778 = vpack.c.bf16 %v746, %v746
  %v779 = vpack.c.bf16 %v747, %v747
  %v780 = vpack.c.bf16 %v748, %v748
  %v781 = vpack.c.bf16 %v749, %v749
  %v782 = vpack.c.bf16 %v750, %v750
  %v783 = vpack.c.bf16 %v751, %v751
  %v784 = vpack.c.bf16 %v752, %v752
  %v785 = vpack.c.bf16 %v753, %v753
  %v786 = vpack.c.bf16 %v754, %v754
  %v787 = vpack.c.bf16 %v755, %v755
  %v788 = vpack.c.bf16 %v756, %v756
  %v789 = vpack.c.bf16 %v757, %v757
  %v790 = vpack.c.bf16 %v758, %v758
  %v791 = vpack.c.bf16 %v759, %v759
  %v792 = vpack.c.bf16 %v760, %v760
  %v793 = vpack.c.bf16 %v761, %v761
  %v794 = vpack.c.bf16 %v762, %v762
  %v795 = vpack.c.bf16 %v763, %v763
  %v796 = vpack.c.bf16 %v764, %v764
  %v797 = vpack.c.bf16 %v765, %v765
  %v798 = vpack.c.bf16 %v766, %v766
  %v799 = vpack.c.bf16 %v767, %v767
  %v800 = vpack.c.bf16 %v768, %v768
  %v801 = vpack.c.bf16 %v769, %v769
  %v802 = vpack.c.bf16 %v770, %v770
  %v803 = vpack.c.bf16 %v771, %v771
  %v804 = vpack.c.bf16 %v772, %v772
  %v805 = vpack.c.bf16 %v773, %v773
  %v806 = vunpack.c.l.bf16 %v774
  %v807 = vunpack.c.l.bf16 %v775
  %v808 = vunpack.c.l.bf16 %v776
  %v809 = vunpack.c.l.bf16 %v777
  %v810 = vunpack.c.l.bf16 %v778
  %v811 = vunpack.c.l.bf16 %v779
  %v812 = vunpack.c.l.bf16 %v780
  %v813 = vunpack.c.l.bf16 %v781
  %v814 = vunpack.c.l.bf16 %v782
  %v815 = vunpack.c.l.bf16 %v783
  %v816 = vunpack.c.l.bf16 %v784
  %v817 = vunpack.c.l.bf16 %v785
  %v818 = vunpack.c.l.bf16 %v786
  %v819 = vunpack.c.l.bf16 %v787
  %v820 = vunpack.c.l.bf16 %v788
  %v821 = vunpack.c.l.bf16 %v789
  %v822 = vunpack.c.l.bf16 %v790
  %v823 = vunpack.c.l.bf16 %v791
  %v824 = vunpack.c.l.bf16 %v792
  %v825 = vunpack.c.l.bf16 %v793
  %v826 = vunpack.c.l.bf16 %v794
  %v827 = vunpack.c.l.bf16 %v795
  %v828 = vunpack.c.l.bf16 %v796
  %v829 = vunpack.c.l.bf16 %v797
  %v830 = vunpack.c.l.bf16 %v798
  %v831 = vunpack.c.l.bf16 %v799
  %v832 = vunpack.c.l.bf16 %v800
  %v833 = vunpack.c.l.bf16 %v801
  %v834 = vunpack.c.l.bf16 %v802
  %v835 = vunpack.c.l.bf16 %v803
  %v836 = vunpack.c.l.bf16 %v804
  %v837 = vunpack.c.l.bf16 %v805
  %v838 = vmax.f32 %v806, 0.0
  %v839 = vmax.f32 %v807, 0.0
  %v840 = vmax.f32 %v808, 0.0
  %v841 = vmax.f32 %v809, 0.0
  %v842 = vmax.f32 %v810, 0.0
  %v843 = vmax.f32 %v811, 0.0
  %v844 = vmax.f32 %v812, 0.0
  %v845 = vmax.f32 %v813, 0.0
  %v846 = vmax.f32 %v814, 0.0
  %v847 = vmax.f32 %v815, 0.0
  %v848 = vmax.f32 %v816, 0.0
  %v849 = vmax.f32 %v817, 0.0
  %v850 = vmax.f32 %v818, 0.0
  %v851 = vmax.f32 %v819, 0.0
  %v852 = vmax.f32 %v820, 0.0
  %v853 = vmax.f32 %v821, 0.0
  %v854 = vmax.f32 %v822, 0.0
  %v855 = vmax.f32 %v823, 0.0
  %v856 = vmax.f32 %v824, 0.0
  %v857 = vmax.f32 %v825, 0.0
  %v858 = vmax.f32 %v826, 0.0
  %v859 = vmax.f32 %v827, 0.0
  %v860 = vmax.f32 %v828, 0.0
  %v861 = vmax.f32 %v829, 0.0
  %v862 = vmax.f32 %v830, 0.0
  %v863 = vmax.f32 %v831, 0.0
  %v864 = vmax.f32 %v832, 0.0
  %v865 = vmax.f32 %v833, 0.0
  %v866 = vmax.f32 %v834, 0.0
  %v867 = vmax.f32 %v835, 0.0
  %v868 = vmax.f32 %v836, 0.0
  %v869 = vmax.f32 %v837, 0.0
  %v870 = vpack.c.bf16 %v839, %v838
  %v871 = vpack.c.bf16 %v841, %v840
  %v872 = vpack.c.bf16 %v843, %v842
  %v873 = vpack.c.bf16 %v845, %v844
  %v874 = vpack.c.bf16 %v847, %v846
  %v875 = vpack.c.bf16 %v849, %v848
  %v876 = vpack.c.bf16 %v851, %v850
  %v877 = vpack.c.bf16 %v853, %v852
  %v878 = vpack.c.bf16 %v855, %v854
  %v879 = vpack.c.bf16 %v857, %v856
  %v880 = vpack.c.bf16 %v859, %v858
  %v881 = vpack.c.bf16 %v861, %v860
  %v882 = vpack.c.bf16 %v863, %v862
  %v883 = vpack.c.bf16 %v865, %v864
  %v884 = vpack.c.bf16 %v867, %v866
  %v885 = vpack.c.bf16 %v869, %v868
  %v886 = vld [vmem:[%s3] sm:$0xff]
  %v887 = vld [vmem:[%s3 + $0x8] sm:$0xff]
  %v888 = vld [vmem:[%s3 + $0x10] sm:$0xff]
  %v889 = vld [vmem:[%s3 + $0x18] sm:$0xff]
  %v890 = vld [vmem:[%s3 + $0x20] sm:$0xff]
  %v891 = vld [vmem:[%s3 + $0x28] sm:$0xff]
  %v892 = vld [vmem:[%s3 + $0x30] sm:$0xff]
  %v893 = vld [vmem:[%s3 + $0x38] sm:$0xff]
  %v894 = vld [vmem:[%s3 + $0x40] sm:$0xff]
  %v895 = vld [vmem:[%s3 + $0x48] sm:$0xff]
  %v896 = vld [vmem:[%s3 + $0x50] sm:$0xff]
  %v897 = vld [vmem:[%s3 + $0x58] sm:$0xff]
  %v898 = vld [vmem:[%s3 + $0x60] sm:$0xff]
  %v899 = vld [vmem:[%s3 + $0x68] sm:$0xff]
  %v900 = vld [vmem:[%s3 + $0x70] sm:$0xff]
  %v901 = vld [vmem:[%s3 + $0x78] sm:$0xff]
  %v902 = vld [vmem:[%s3 + $0x80] sm:$0xff]
  %v903 = vld [vmem:[%s3 + $0x88] sm:$0xff]
  %v904 = vld [vmem:[%s3 + $0x90] sm:$0xff]
  %v905 = vld [vmem:[%s3 + $0x98] sm:$0xff]
  %v906 = vld [vmem:[%s3 + $0xa0] sm:$0xff]
  %v907 = vld [vmem:[%s3 + $0xa8] sm:$0xff]
  %v908 = vld [vmem:[%s3 + $0xb0] sm:$0xff]
  %v909 = vld [vmem:[%s3 + $0xb8] sm:$0xff]
  %v910 = vld [vmem:[%s3 + $0xc0] sm:$0xff]
  %v911 = vld [vmem:[%s3 + $0xc8] sm:$0xff]
  %v912 = vld [vmem:[%s3 + $0xd0] sm:$0xff]
  %v913 = vld [vmem:[%s3 + $0xd8] sm:$0xff]
  %v914 = vld [vmem:[%s3 + $0xe0] sm:$0xff]
  %v915 = vld [vmem:[%s3 + $0xe8] sm:$0xff]
  %v916 = vld [vmem:[%s3 + $0xf0] sm:$0xff]
  %v917 = vld [vmem:[%s3 + $0xf8] sm:$0xff]
  %v950 = vunpack.c.l.b16 %v886
  %v951 = vunpack.c.h.b16 %v886
  %v952 = vunpack.c.l.b16 %v887
  %v953 = vunpack.c.h.b16 %v887
  %v954 = vunpack.c.l.b16 %v888
  %v955 = vunpack.c.h.b16 %v888
  %v956 = vunpack.c.l.b16 %v889
  %v957 = vunpack.c.h.b16 %v889
  %v958 = vunpack.c.l.b16 %v890
  %v959 = vunpack.c.h.b16 %v890
  %v960 = vunpack.c.l.b16 %v891
  %v961 = vunpack.c.h.b16 %v891
  %v962 = vunpack.c.l.b16 %v892
  %v963 = vunpack.c.h.b16 %v892
  %v964 = vunpack.c.l.b16 %v893
  %v965 = vunpack.c.h.b16 %v893
  %v966 = vunpack.c.l.b16 %v894
  %v967 = vunpack.c.h.b16 %v894
  %v968 = vunpack.c.l.b16 %v895
  %v969 = vunpack.c.h.b16 %v895
  %v970 = vunpack.c.l.b16 %v896
  %v971 = vunpack.c.h.b16 %v896
  %v972 = vunpack.c.l.b16 %v897
  %v973 = vunpack.c.h.b16 %v897
  %v974 = vunpack.c.l.b16 %v898
  %v975 = vunpack.c.h.b16 %v898
  %v976 = vunpack.c.l.b16 %v899
  %v977 = vunpack.c.h.b16 %v899
  %v978 = vunpack.c.l.b16 %v900
  %v979 = vunpack.c.h.b16 %v900
  %v980 = vunpack.c.l.b16 %v901
  %v981 = vunpack.c.h.b16 %v901
  %v982 = vunpack.c.l.b16 %v902
  %v983 = vunpack.c.h.b16 %v902
  %v984 = vunpack.c.l.b16 %v903
  %v985 = vunpack.c.h.b16 %v903
  %v986 = vunpack.c.l.b16 %v904
  %v987 = vunpack.c.h.b16 %v904
  %v988 = vunpack.c.l.b16 %v905
  %v989 = vunpack.c.h.b16 %v905
  %v990 = vunpack.c.l.b16 %v906
  %v991 = vunpack.c.h.b16 %v906
  %v992 = vunpack.c.l.b16 %v907
  %v993 = vunpack.c.h.b16 %v907
  %v994 = vunpack.c.l.b16 %v908
  %v995 = vunpack.c.h.b16 %v908
  %v996 = vunpack.c.l.b16 %v909
  %v997 = vunpack.c.h.b16 %v909
  %v998 = vunpack.c.l.b16 %v910
  %v999 = vunpack.c.h.b16 %v910
  %v1000 = vunpack.c.l.b16 %v911
  %v1001 = vunpack.c.h.b16 %v911
  %v1002 = vunpack.c.l.b16 %v912
  %v1003 = vunpack.c.h.b16 %v912
  %v1004 = vunpack.c.l.b16 %v913
  %v1005 = vunpack.c.h.b16 %v913
  %v1006 = vunpack.c.l.b16 %v914
  %v1007 = vunpack.c.h.b16 %v914
  %v1008 = vunpack.c.l.b16 %v915
  %v1009 = vunpack.c.h.b16 %v915
  %v1010 = vunpack.c.l.b16 %v916
  %v1011 = vunpack.c.h.b16 %v916
  %v1012 = vunpack.c.l.b16 %v917
  %v1013 = vunpack.c.h.b16 %v917
  %v1014 = vpack.c.b16 %v952, %v950
  %v1015 = vpack.c.b16 %v953, %v951
  %v1016 = vpack.c.b16 %v956, %v954
  %v1017 = vpack.c.b16 %v957, %v955
  %v1018 = vpack.c.b16 %v960, %v958
  %v1019 = vpack.c.b16 %v961, %v959
  %v1020 = vpack.c.b16 %v964, %v962
  %v1021 = vpack.c.b16 %v965, %v963
  %v1022 = vpack.c.b16 %v968, %v966
  %v1023 = vpack.c.b16 %v969, %v967
  %v1024 = vpack.c.b16 %v972, %v970
  %v1025 = vpack.c.b16 %v973, %v971
  %v1026 = vpack.c.b16 %v976, %v974
  %v1027 = vpack.c.b16 %v977, %v975
  %v1028 = vpack.c.b16 %v980, %v978
  %v1029 = vpack.c.b16 %v981, %v979
  %v1030 = vpack.c.b16 %v984, %v982
  %v1031 = vpack.c.b16 %v985, %v983
  %v1032 = vpack.c.b16 %v988, %v986
  %v1033 = vpack.c.b16 %v989, %v987
  %v1034 = vpack.c.b16 %v992, %v990
  %v1035 = vpack.c.b16 %v993, %v991
  %v1036 = vpack.c.b16 %v996, %v994
  %v1037 = vpack.c.b16 %v997, %v995
  %v1038 = vpack.c.b16 %v1000, %v998
  %v1039 = vpack.c.b16 %v1001, %v999
  %v1040 = vpack.c.b16 %v1004, %v1002
  %v1041 = vpack.c.b16 %v1005, %v1003
  %v1042 = vpack.c.b16 %v1008, %v1006
  %v1043 = vpack.c.b16 %v1009, %v1007
  %v1044 = vpack.c.b16 %v1012, %v1010
  %v1045 = vpack.c.b16 %v1013, %v1011
  %1078 = vmatpush.bf16.msra.mxu0 %v877
  %1079 = vmatpush.bf16.msra.mxu0 %v876
  %1080 = vmatpush.bf16.msra.mxu0 %v875
  %1081 = vmatpush.bf16.msra.mxu0 %v874
  %1082 = vmatpush.bf16.msra.mxu0 %v873
  %1083 = vmatpush.bf16.msra.mxu0 %v872
  %1084 = vmatpush.bf16.msra.mxu0 %v871
  %1085 = vmatpush.bf16.msra.mxu0 %v870
  %1086 = vmatmul.bf16.gmra.mxu0 %v1014
  %v1087 = vpop.f32.mrf.mxu0
  %v1088 = vadd.f32 0.0, %v1087
  %v1089 = vpop.f32.mrf.mxu0
  %v1090 = vadd.f32 0.0, %v1089
  %1091 = vmatmul.bf16.gmra.mxu0 %v1016
  %v1092 = vpop.f32.mrf.mxu0
  %v1093 = vadd.f32 0.0, %v1092
  %v1094 = vpop.f32.mrf.mxu0
  %v1095 = vadd.f32 0.0, %v1094
  %1096 = vmatmul.bf16.gmra.mxu0 %v1018
  %v1097 = vpop.f32.mrf.mxu0
  %v1098 = vadd.f32 0.0, %v1097
  %v1099 = vpop.f32.mrf.mxu0
  %v1100 = vadd.f32 0.0, %v1099
  %1101 = vmatmul.bf16.gmra.mxu0 %v1020
  %v1102 = vpop.f32.mrf.mxu0
  %v1103 = vadd.f32 0.0, %v1102
  %v1104 = vpop.f32.mrf.mxu0
  %v1105 = vadd.f32 0.0, %v1104
  %1106 = vmatmul.bf16.gmra.mxu0 %v1022
  %v1107 = vpop.f32.mrf.mxu0
  %v1108 = vadd.f32 0.0, %v1107
  %v1109 = vpop.f32.mrf.mxu0
  %v1110 = vadd.f32 0.0, %v1109
  %1111 = vmatmul.bf16.gmra.mxu0 %v1024
  %v1112 = vpop.f32.mrf.mxu0
  %v1113 = vadd.f32 0.0, %v1112
  %v1114 = vpop.f32.mrf.mxu0
  %v1115 = vadd.f32 0.0, %v1114
  %1116 = vmatmul.bf16.gmra.mxu0 %v1026
  %v1117 = vpop.f32.mrf.mxu0
  %v1118 = vadd.f32 0.0, %v1117
  %v1119 = vpop.f32.mrf.mxu0
  %v1120 = vadd.f32 0.0, %v1119
  %1121 = vmatmul.bf16.gmra.mxu0 %v1028
  %v1122 = vpop.f32.mrf.mxu0
  %v1123 = vadd.f32 0.0, %v1122
  %v1124 = vpop.f32.mrf.mxu0
  %v1125 = vadd.f32 0.0, %v1124
  %1126 = vmatmul.bf16.gmra.mxu0 %v1030
  %v1127 = vpop.f32.mrf.mxu0
  %v1128 = vadd.f32 0.0, %v1127
  %v1129 = vpop.f32.mrf.mxu0
  %v1130 = vadd.f32 0.0, %v1129
  %1131 = vmatmul.bf16.gmra.mxu0 %v1032
  %v1132 = vpop.f32.mrf.mxu0
  %v1133 = vadd.f32 0.0, %v1132
  %v1134 = vpop.f32.mrf.mxu0
  %v1135 = vadd.f32 0.0, %v1134
  %1136 = vmatmul.bf16.gmra.mxu0 %v1034
  %v1137 = vpop.f32.mrf.mxu0
  %v1138 = vadd.f32 0.0, %v1137
  %v1139 = vpop.f32.mrf.mxu0
  %v1140 = vadd.f32 0.0, %v1139
  %1141 = vmatmul.bf16.gmra.mxu0 %v1036
  %v1142 = vpop.f32.mrf.mxu0
  %v1143 = vadd.f32 0.0, %v1142
  %v1144 = vpop.f32.mrf.mxu0
  %v1145 = vadd.f32 0.0, %v1144
  %1146 = vmatmul.bf16.gmra.mxu0 %v1038
  %v1147 = vpop.f32.mrf.mxu0
  %v1148 = vadd.f32 0.0, %v1147
  %v1149 = vpop.f32.mrf.mxu0
  %v1150 = vadd.f32 0.0, %v1149
  %1151 = vmatmul.bf16.gmra.mxu0 %v1040
  %v1152 = vpop.f32.mrf.mxu0
  %v1153 = vadd.f32 0.0, %v1152
  %v1154 = vpop.f32.mrf.mxu0
  %v1155 = vadd.f32 0.0, %v1154
  %1156 = vmatmul.bf16.gmra.mxu0 %v1042
  %v1157 = vpop.f32.mrf.mxu0
  %v1158 = vadd.f32 0.0, %v1157
  %v1159 = vpop.f32.mrf.mxu0
  %v1160 = vadd.f32 0.0, %v1159
  %1161 = vmatmul.bf16.gmra.mxu0 %v1044
  %v1162 = vpop.f32.mrf.mxu0
  %v1163 = vadd.f32 0.0, %v1162
  %v1164 = vpop.f32.mrf.mxu0
  %v1165 = vadd.f32 0.0, %v1164
  %1166 = vdwg.mxu0
  %1167 = vmatpush.bf16.msra.mxu0 %v885
  %1168 = vmatpush.bf16.msra.mxu0 %v884
  %1169 = vmatpush.bf16.msra.mxu0 %v883
  %1170 = vmatpush.bf16.msra.mxu0 %v882
  %1171 = vmatpush.bf16.msra.mxu0 %v881
  %1172 = vmatpush.bf16.msra.mxu0 %v880
  %1173 = vmatpush.bf16.msra.mxu0 %v879
  %1174 = vmatpush.bf16.msra.mxu0 %v878
  %1175 = vmatmul.bf16.gmra.mxu0 %v1015
  %v1176 = vpop.f32.mrf.mxu0
  %v1177 = vadd.f32 %v1088, %v1176
  %v1178 = vpop.f32.mrf.mxu0
  %v1179 = vadd.f32 %v1090, %v1178
  %1180 = vmatmul.bf16.gmra.mxu0 %v1017
  %v1181 = vpop.f32.mrf.mxu0
  %v1182 = vadd.f32 %v1093, %v1181
  %v1183 = vpop.f32.mrf.mxu0
  %v1184 = vadd.f32 %v1095, %v1183
  %1185 = vmatmul.bf16.gmra.mxu0 %v1019
  %v1186 = vpop.f32.mrf.mxu0
  %v1187 = vadd.f32 %v1098, %v1186
  %v1188 = vpop.f32.mrf.mxu0
  %v1189 = vadd.f32 %v1100, %v1188
  %1190 = vmatmul.bf16.gmra.mxu0 %v1021
  %v1191 = vpop.f32.mrf.mxu0
  %v1192 = vadd.f32 %v1103, %v1191
  %v1193 = vpop.f32.mrf.mxu0
  %v1194 = vadd.f32 %v1105, %v1193
  %1195 = vmatmul.bf16.gmra.mxu0 %v1023
  %v1196 = vpop.f32.mrf.mxu0
  %v1197 = vadd.f32 %v1108, %v1196
  %v1198 = vpop.f32.mrf.mxu0
  %v1199 = vadd.f32 %v1110, %v1198
  %1200 = vmatmul.bf16.gmra.mxu0 %v1025
  %v1201 = vpop.f32.mrf.mxu0
  %v1202 = vadd.f32 %v1113, %v1201
  %v1203 = vpop.f32.mrf.mxu0
  %v1204 = vadd.f32 %v1115, %v1203
  %1205 = vmatmul.bf16.gmra.mxu0 %v1027
  %v1206 = vpop.f32.mrf.mxu0
  %v1207 = vadd.f32 %v1118, %v1206
  %v1208 = vpop.f32.mrf.mxu0
  %v1209 = vadd.f32 %v1120, %v1208
  %1210 = vmatmul.bf16.gmra.mxu0 %v1029
  %v1211 = vpop.f32.mrf.mxu0
  %v1212 = vadd.f32 %v1123, %v1211
  %v1213 = vpop.f32.mrf.mxu0
  %v1214 = vadd.f32 %v1125, %v1213
  %1215 = vmatmul.bf16.gmra.mxu0 %v1031
  %v1216 = vpop.f32.mrf.mxu0
  %v1217 = vadd.f32 %v1128, %v1216
  %v1218 = vpop.f32.mrf.mxu0
  %v1219 = vadd.f32 %v1130, %v1218
  %1220 = vmatmul.bf16.gmra.mxu0 %v1033
  %v1221 = vpop.f32.mrf.mxu0
  %v1222 = vadd.f32 %v1133, %v1221
  %v1223 = vpop.f32.mrf.mxu0
  %v1224 = vadd.f32 %v1135, %v1223
  %1225 = vmatmul.bf16.gmra.mxu0 %v1035
  %v1226 = vpop.f32.mrf.mxu0
  %v1227 = vadd.f32 %v1138, %v1226
  %v1228 = vpop.f32.mrf.mxu0
  %v1229 = vadd.f32 %v1140, %v1228
  %1230 = vmatmul.bf16.gmra.mxu0 %v1037
  %v1231 = vpop.f32.mrf.mxu0
  %v1232 = vadd.f32 %v1143, %v1231
  %v1233 = vpop.f32.mrf.mxu0
  %v1234 = vadd.f32 %v1145, %v1233
  %1235 = vmatmul.bf16.gmra.mxu0 %v1039
  %v1236 = vpop.f32.mrf.mxu0
  %v1237 = vadd.f32 %v1148, %v1236
  %v1238 = vpop.f32.mrf.mxu0
  %v1239 = vadd.f32 %v1150, %v1238
  %1240 = vmatmul.bf16.gmra.mxu0 %v1041
  %v1241 = vpop.f32.mrf.mxu0
  %v1242 = vadd.f32 %v1153, %v1241
  %v1243 = vpop.f32.mrf.mxu0
  %v1244 = vadd.f32 %v1155, %v1243
  %1245 = vmatmul.bf16.gmra.mxu0 %v1043
  %v1246 = vpop.f32.mrf.mxu0
  %v1247 = vadd.f32 %v1158, %v1246
  %v1248 = vpop.f32.mrf.mxu0
  %v1249 = vadd.f32 %v1160, %v1248
  %1250 = vmatmul.bf16.gmra.mxu0 %v1045
  %v1251 = vpop.f32.mrf.mxu0
  %v1252 = vadd.f32 %v1163, %v1251
  %v1253 = vpop.f32.mrf.mxu0
  %v1254 = vadd.f32 %v1165, %v1253
  %1255 = vdwg.mxu0
  %v1256 = vpack.c.bf16 %v1177, %v1177
  %v1257 = vpack.c.bf16 %v1179, %v1179
  %v1258 = vpack.c.bf16 %v1182, %v1182
  %v1259 = vpack.c.bf16 %v1184, %v1184
  %v1260 = vpack.c.bf16 %v1187, %v1187
  %v1261 = vpack.c.bf16 %v1189, %v1189
  %v1262 = vpack.c.bf16 %v1192, %v1192
  %v1263 = vpack.c.bf16 %v1194, %v1194
  %v1264 = vpack.c.bf16 %v1197, %v1197
  %v1265 = vpack.c.bf16 %v1199, %v1199
  %v1266 = vpack.c.bf16 %v1202, %v1202
  %v1267 = vpack.c.bf16 %v1204, %v1204
  %v1268 = vpack.c.bf16 %v1207, %v1207
  %v1269 = vpack.c.bf16 %v1209, %v1209
  %v1270 = vpack.c.bf16 %v1212, %v1212
  %v1271 = vpack.c.bf16 %v1214, %v1214
  %v1272 = vpack.c.bf16 %v1217, %v1217
  %v1273 = vpack.c.bf16 %v1219, %v1219
  %v1274 = vpack.c.bf16 %v1222, %v1222
  %v1275 = vpack.c.bf16 %v1224, %v1224
  %v1276 = vpack.c.bf16 %v1227, %v1227
  %v1277 = vpack.c.bf16 %v1229, %v1229
  %v1278 = vpack.c.bf16 %v1232, %v1232
  %v1279 = vpack.c.bf16 %v1234, %v1234
  %v1280 = vpack.c.bf16 %v1237, %v1237
  %v1281 = vpack.c.bf16 %v1239, %v1239
  %v1282 = vpack.c.bf16 %v1242, %v1242
  %v1283 = vpack.c.bf16 %v1244, %v1244
  %v1284 = vpack.c.bf16 %v1247, %v1247
  %v1285 = vpack.c.bf16 %v1249, %v1249
  %v1286 = vpack.c.bf16 %v1252, %v1252
  %v1287 = vpack.c.bf16 %v1254, %v1254
  %v1288 = vld [vmem:[%s4] sm:$0xf]
  %v1289 = vld [vmem:[%s4 + $0x4] sm:$0xf]
  %v1290 = vld [vmem:[%s4 + $0x8] sm:$0xf]
  %v1291 = vld [vmem:[%s4 + $0xc] sm:$0xf]
  %v1292 = vld [vmem:[%s4 + $0x10] sm:$0xf]
  %v1293 = vld [vmem:[%s4 + $0x14] sm:$0xf]
  %v1294 = vld [vmem:[%s4 + $0x18] sm:$0xf]
  %v1295 = vld [vmem:[%s4 + $0x1c] sm:$0xf]
  %v1296 = vld [vmem:[%s4 + $0x20] sm:$0xf]
  %v1297 = vld [vmem:[%s4 + $0x24] sm:$0xf]
  %v1298 = vld [vmem:[%s4 + $0x28] sm:$0xf]
  %v1299 = vld [vmem:[%s4 + $0x2c] sm:$0xf]
  %v1300 = vld [vmem:[%s4 + $0x30] sm:$0xf]
  %v1301 = vld [vmem:[%s4 + $0x34] sm:$0xf]
  %v1302 = vld [vmem:[%s4 + $0x38] sm:$0xf]
  %v1303 = vld [vmem:[%s4 + $0x3c] sm:$0xf]
  %v1304 = vld [vmem:[%s4 + $0x40] sm:$0xf]
  %v1305 = vld [vmem:[%s4 + $0x44] sm:$0xf]
  %v1306 = vld [vmem:[%s4 + $0x48] sm:$0xf]
  %v1307 = vld [vmem:[%s4 + $0x4c] sm:$0xf]
  %v1308 = vld [vmem:[%s4 + $0x50] sm:$0xf]
  %v1309 = vld [vmem:[%s4 + $0x54] sm:$0xf]
  %v1310 = vld [vmem:[%s4 + $0x58] sm:$0xf]
  %v1311 = vld [vmem:[%s4 + $0x5c] sm:$0xf]
  %v1312 = vld [vmem:[%s4 + $0x60] sm:$0xf]
  %v1313 = vld [vmem:[%s4 + $0x64] sm:$0xf]
  %v1314 = vld [vmem:[%s4 + $0x68] sm:$0xf]
  %v1315 = vld [vmem:[%s4 + $0x6c] sm:$0xf]
  %v1316 = vld [vmem:[%s4 + $0x70] sm:$0xf]
  %v1317 = vld [vmem:[%s4 + $0x74] sm:$0xf]
  %v1318 = vld [vmem:[%s4 + $0x78] sm:$0xf]
  %v1319 = vld [vmem:[%s4 + $0x7c] sm:$0xf]
  %1321 = vset.pattern.permute.xlu0 0
  %1322 = vperm.xlu0 %1321, %v1288
  %v1323 = vpop.permute.xlu0 %1322
  %v1326 = vunpack.c.l.s4 839922192
  %v1327 = vunpack.c.0.s8 %v1326
  %v1328 = vperm.slane %v1323, %v1327
  %1330 = vset.pattern.permute.xlu0 0
  %1331 = vperm.xlu0 %1330, %v1289
  %v1332 = vpop.permute.xlu0 %1331
  %v1335 = vunpack.c.l.s4 839922192
  %v1336 = vunpack.c.0.s8 %v1335
  %v1337 = vperm.slane %v1332, %v1336
  %1339 = vset.pattern.permute.xlu0 0
  %1340 = vperm.xlu0 %1339, %v1290
  %v1341 = vpop.permute.xlu0 %1340
  %v1344 = vunpack.c.l.s4 839922192
  %v1345 = vunpack.c.0.s8 %v1344
  %v1346 = vperm.slane %v1341, %v1345
  %1348 = vset.pattern.permute.xlu0 0
  %1349 = vperm.xlu0 %1348, %v1291
  %v1350 = vpop.permute.xlu0 %1349
  %v1353 = vunpack.c.l.s4 839922192
  %v1354 = vunpack.c.0.s8 %v1353
  %v1355 = vperm.slane %v1350, %v1354
  %1357 = vset.pattern.permute.xlu0 0
  %1358 = vperm.xlu0 %1357, %v1292
  %v1359 = vpop.permute.xlu0 %1358
  %v1362 = vunpack.c.l.s4 839922192
  %v1363 = vunpack.c.0.s8 %v1362
  %v1364 = vperm.slane %v1359, %v1363
  %1366 = vset.pattern.permute.xlu0 0
  %1367 = vperm.xlu0 %1366, %v1293
  %v1368 = vpop.permute.xlu0 %1367
  %v1371 = vunpack.c.l.s4 839922192
  %v1372 = vunpack.c.0.s8 %v1371
  %v1373 = vperm.slane %v1368, %v1372
  %1375 = vset.pattern.permute.xlu0 0
  %1376 = vperm.xlu0 %1375, %v1294
  %v1377 = vpop.permute.xlu0 %1376
  %v1380 = vunpack.c.l.s4 839922192
  %v1381 = vunpack.c.0.s8 %v1380
  %v1382 = vperm.slane %v1377, %v1381
  %1384 = vset.pattern.permute.xlu0 0
  %1385 = vperm.xlu0 %1384, %v1295
  %v1386 = vpop.permute.xlu0 %1385
  %v1389 = vunpack.c.l.s4 839922192
  %v1390 = vunpack.c.0.s8 %v1389
  %v1391 = vperm.slane %v1386, %v1390
  %1393 = vset.pattern.permute.xlu0 0
  %1394 = vperm.xlu0 %1393, %v1296
  %v1395 = vpop.permute.xlu0 %1394
  %v1398 = vunpack.c.l.s4 839922192
  %v1399 = vunpack.c.0.s8 %v1398
  %v1400 = vperm.slane %v1395, %v1399
  %1402 = vset.pattern.permute.xlu0 0
  %1403 = vperm.xlu0 %1402, %v1297
  %v1404 = vpop.permute.xlu0 %1403
  %v1407 = vunpack.c.l.s4 839922192
  %v1408 = vunpack.c.0.s8 %v1407
  %v1409 = vperm.slane %v1404, %v1408
  %1411 = vset.pattern.permute.xlu0 0
  %1412 = vperm.xlu0 %1411, %v1298
  %v1413 = vpop.permute.xlu0 %1412
  %v1416 = vunpack.c.l.s4 839922192
  %v1417 = vunpack.c.0.s8 %v1416
  %v1418 = vperm.slane %v1413, %v1417
  %1420 = vset.pattern.permute.xlu0 0
  %1421 = vperm.xlu0 %1420, %v1299
  %v1422 = vpop.permute.xlu0 %1421
  %v1425 = vunpack.c.l.s4 839922192
  %v1426 = vunpack.c.0.s8 %v1425
  %v1427 = vperm.slane %v1422, %v1426
  %1429 = vset.pattern.permute.xlu0 0
  %1430 = vperm.xlu0 %1429, %v1300
  %v1431 = vpop.permute.xlu0 %1430
  %v1434 = vunpack.c.l.s4 839922192
  %v1435 = vunpack.c.0.s8 %v1434
  %v1436 = vperm.slane %v1431, %v1435
  %1438 = vset.pattern.permute.xlu0 0
  %1439 = vperm.xlu0 %1438, %v1301
  %v1440 = vpop.permute.xlu0 %1439
  %v1443 = vunpack.c.l.s4 839922192
  %v1444 = vunpack.c.0.s8 %v1443
  %v1445 = vperm.slane %v1440, %v1444
  %1447 = vset.pattern.permute.xlu0 0
  %1448 = vperm.xlu0 %1447, %v1302
  %v1449 = vpop.permute.xlu0 %1448
  %v1452 = vunpack.c.l.s4 839922192
  %v1453 = vunpack.c.0.s8 %v1452
  %v1454 = vperm.slane %v1449, %v1453
  %1456 = vset.pattern.permute.xlu0 0
  %1457 = vperm.xlu0 %1456, %v1303
  %v1458 = vpop.permute.xlu0 %1457
  %v1461 = vunpack.c.l.s4 839922192
  %v1462 = vunpack.c.0.s8 %v1461
  %v1463 = vperm.slane %v1458, %v1462
  %1465 = vset.pattern.permute.xlu0 0
  %1466 = vperm.xlu0 %1465, %v1304
  %v1467 = vpop.permute.xlu0 %1466
  %v1470 = vunpack.c.l.s4 839922192
  %v1471 = vunpack.c.0.s8 %v1470
  %v1472 = vperm.slane %v1467, %v1471
  %1474 = vset.pattern.permute.xlu0 0
  %1475 = vperm.xlu0 %1474, %v1305
  %v1476 = vpop.permute.xlu0 %1475
  %v1479 = vunpack.c.l.s4 839922192
  %v1480 = vunpack.c.0.s8 %v1479
  %v1481 = vperm.slane %v1476, %v1480
  %1483 = vset.pattern.permute.xlu0 0
  %1484 = vperm.xlu0 %1483, %v1306
  %v1485 = vpop.permute.xlu0 %1484
  %v1488 = vunpack.c.l.s4 839922192
  %v1489 = vunpack.c.0.s8 %v1488
  %v1490 = vperm.slane %v1485, %v1489
  %1492 = vset.pattern.permute.xlu0 0
  %1493 = vperm.xlu0 %1492, %v1307
  %v1494 = vpop.permute.xlu0 %1493
  %v1497 = vunpack.c.l.s4 839922192
  %v1498 = vunpack.c.0.s8 %v1497
  %v1499 = vperm.slane %v1494, %v1498
  %1501 = vset.pattern.permute.xlu0 0
  %1502 = vperm.xlu0 %1501, %v1308
  %v1503 = vpop.permute.xlu0 %1502
  %v1506 = vunpack.c.l.s4 839922192
  %v1507 = vunpack.c.0.s8 %v1506
  %v1508 = vperm.slane %v1503, %v1507
  %1510 = vset.pattern.permute.xlu0 0
  %1511 = vperm.xlu0 %1510, %v1309
  %v1512 = vpop.permute.xlu0 %1511
  %v1515 = vunpack.c.l.s4 839922192
  %v1516 = vunpack.c.0.s8 %v1515
  %v1517 = vperm.slane %v1512, %v1516
  %1519 = vset.pattern.permute.xlu0 0
  %1520 = vperm.xlu0 %1519, %v1310
  %v1521 = vpop.permute.xlu0 %1520
  %v1524 = vunpack.c.l.s4 839922192
  %v1525 = vunpack.c.0.s8 %v1524
  %v1526 = vperm.slane %v1521, %v1525
  %1528 = vset.pattern.permute.xlu0 0
  %1529 = vperm.xlu0 %1528, %v1311
  %v1530 = vpop.permute.xlu0 %1529
  %v1533 = vunpack.c.l.s4 839922192
  %v1534 = vunpack.c.0.s8 %v1533
  %v1535 = vperm.slane %v1530, %v1534
  %1537 = vset.pattern.permute.xlu0 0
  %1538 = vperm.xlu0 %1537, %v1312
  %v1539 = vpop.permute.xlu0 %1538
  %v1542 = vunpack.c.l.s4 839922192
  %v1543 = vunpack.c.0.s8 %v1542
  %v1544 = vperm.slane %v1539, %v1543
  %1546 = vset.pattern.permute.xlu0 0
  %1547 = vperm.xlu0 %1546, %v1313
  %v1548 = vpop.permute.xlu0 %1547
  %v1551 = vunpack.c.l.s4 839922192
  %v1552 = vunpack.c.0.s8 %v1551
  %v1553 = vperm.slane %v1548, %v1552
  %1555 = vset.pattern.permute.xlu0 0
  %1556 = vperm.xlu0 %1555, %v1314
  %v1557 = vpop.permute.xlu0 %1556
  %v1560 = vunpack.c.l.s4 839922192
  %v1561 = vunpack.c.0.s8 %v1560
  %v1562 = vperm.slane %v1557, %v1561
  %1564 = vset.pattern.permute.xlu0 0
  %1565 = vperm.xlu0 %1564, %v1315
  %v1566 = vpop.permute.xlu0 %1565
  %v1569 = vunpack.c.l.s4 839922192
  %v1570 = vunpack.c.0.s8 %v1569
  %v1571 = vperm.slane %v1566, %v1570
  %1573 = vset.pattern.permute.xlu0 0
  %1574 = vperm.xlu0 %1573, %v1316
  %v1575 = vpop.permute.xlu0 %1574
  %v1578 = vunpack.c.l.s4 839922192
  %v1579 = vunpack.c.0.s8 %v1578
  %v1580 = vperm.slane %v1575, %v1579
  %1582 = vset.pattern.permute.xlu0 0
  %1583 = vperm.xlu0 %1582, %v1317
  %v1584 = vpop.permute.xlu0 %1583
  %v1587 = vunpack.c.l.s4 839922192
  %v1588 = vunpack.c.0.s8 %v1587
  %v1589 = vperm.slane %v1584, %v1588
  %1591 = vset.pattern.permute.xlu0 0
  %1592 = vperm.xlu0 %1591, %v1318
  %v1593 = vpop.permute.xlu0 %1592
  %v1596 = vunpack.c.l.s4 839922192
  %v1597 = vunpack.c.0.s8 %v1596
  %v1598 = vperm.slane %v1593, %v1597
  %1600 = vset.pattern.permute.xlu0 0
  %1601 = vperm.xlu0 %1600, %v1319
  %v1602 = vpop.permute.xlu0 %1601
  %v1605 = vunpack.c.l.s4 839922192
  %v1606 = vunpack.c.0.s8 %v1605
  %v1607 = vperm.slane %v1602, %v1606
  %v1608 = vunpack.c.l.bf16 %v1256
  %v1609 = vunpack.c.l.bf16 %v1257
  %v1610 = vunpack.c.l.bf16 %v1258
  %v1611 = vunpack.c.l.bf16 %v1259
  %v1612 = vunpack.c.l.bf16 %v1260
  %v1613 = vunpack.c.l.bf16 %v1261
  %v1614 = vunpack.c.l.bf16 %v1262
  %v1615 = vunpack.c.l.bf16 %v1263
  %v1616 = vunpack.c.l.bf16 %v1264
  %v1617 = vunpack.c.l.bf16 %v1265
  %v1618 = vunpack.c.l.bf16 %v1266
  %v1619 = vunpack.c.l.bf16 %v1267
  %v1620 = vunpack.c.l.bf16 %v1268
  %v1621 = vunpack.c.l.bf16 %v1269
  %v1622 = vunpack.c.l.bf16 %v1270
  %v1623 = vunpack.c.l.bf16 %v1271
  %v1624 = vunpack.c.l.bf16 %v1272
  %v1625 = vunpack.c.l.bf16 %v1273
  %v1626 = vunpack.c.l.bf16 %v1274
  %v1627 = vunpack.c.l.bf16 %v1275
  %v1628 = vunpack.c.l.bf16 %v1276
  %v1629 = vunpack.c.l.bf16 %v1277
  %v1630 = vunpack.c.l.bf16 %v1278
  %v1631 = vunpack.c.l.bf16 %v1279
  %v1632 = vunpack.c.l.bf16 %v1280
  %v1633 = vunpack.c.l.bf16 %v1281
  %v1634 = vunpack.c.l.bf16 %v1282
  %v1635 = vunpack.c.l.bf16 %v1283
  %v1636 = vunpack.c.l.bf16 %v1284
  %v1637 = vunpack.c.l.bf16 %v1285
  %v1638 = vunpack.c.l.bf16 %v1286
  %v1639 = vunpack.c.l.bf16 %v1287
  %v1640 = vunpack.c.l.bf16 %v1328
  %v1641 = vunpack.c.l.bf16 %v1337
  %v1642 = vunpack.c.l.bf16 %v1346
  %v1643 = vunpack.c.l.bf16 %v1355
  %v1644 = vunpack.c.l.bf16 %v1364
  %v1645 = vunpack.c.l.bf16 %v1373
  %v1646 = vunpack.c.l.bf16 %v1382
  %v1647 = vunpack.c.l.bf16 %v1391
  %v1648 = vunpack.c.l.bf16 %v1400
  %v1649 = vunpack.c.l.bf16 %v1409
  %v1650 = vunpack.c.l.bf16 %v1418
  %v1651 = vunpack.c.l.bf16 %v1427
  %v1652 = vunpack.c.l.bf16 %v1436
  %v1653 = vunpack.c.l.bf16 %v1445
  %v1654 = vunpack.c.l.bf16 %v1454
  %v1655 = vunpack.c.l.bf16 %v1463
  %v1656 = vunpack.c.l.bf16 %v1472
  %v1657 = vunpack.c.l.bf16 %v1481
  %v1658 = vunpack.c.l.bf16 %v1490
  %v1659 = vunpack.c.l.bf16 %v1499
  %v1660 = vunpack.c.l.bf16 %v1508
  %v1661 = vunpack.c.l.bf16 %v1517
  %v1662 = vunpack.c.l.bf16 %v1526
  %v1663 = vunpack.c.l.bf16 %v1535
  %v1664 = vunpack.c.l.bf16 %v1544
  %v1665 = vunpack.c.l.bf16 %v1553
  %v1666 = vunpack.c.l.bf16 %v1562
  %v1667 = vunpack.c.l.bf16 %v1571
  %v1668 = vunpack.c.l.bf16 %v1580
  %v1669 = vunpack.c.l.bf16 %v1589
  %v1670 = vunpack.c.l.bf16 %v1598
  %v1671 = vunpack.c.l.bf16 %v1607
  %v1672 = vadd.f32 %v1608, %v1640
  %v1673 = vadd.f32 %v1609, %v1641
  %v1674 = vadd.f32 %v1610, %v1642
  %v1675 = vadd.f32 %v1611, %v1643
  %v1676 = vadd.f32 %v1612, %v1644
  %v1677 = vadd.f32 %v1613, %v1645
  %v1678 = vadd.f32 %v1614, %v1646
  %v1679 = vadd.f32 %v1615, %v1647
  %v1680 = vadd.f32 %v1616, %v1648
  %v1681 = vadd.f32 %v1617, %v1649
  %v1682 = vadd.f32 %v1618, %v1650
  %v1683 = vadd.f32 %v1619, %v1651
  %v1684 = vadd.f32 %v1620, %v1652
  %v1685 = vadd.f32 %v1621, %v1653
  %v1686 = vadd.f32 %v1622, %v1654
  %v1687 = vadd.f32 %v1623, %v1655
  %v1688 = vadd.f32 %v1624, %v1656
  %v1689 = vadd.f32 %v1625, %v1657
  %v1690 = vadd.f32 %v1626, %v1658
  %v1691 = vadd.f32 %v1627, %v1659
  %v1692 = vadd.f32 %v1628, %v1660
  %v1693 = vadd.f32 %v1629, %v1661
  %v1694 = vadd.f32 %v1630, %v1662
  %v1695 = vadd.f32 %v1631, %v1663
  %v1696 = vadd.f32 %v1632, %v1664
  %v1697 = vadd.f32 %v1633, %v1665
  %v1698 = vadd.f32 %v1634, %v1666
  %v1699 = vadd.f32 %v1635, %v1667
  %v1700 = vadd.f32 %v1636, %v1668
  %v1701 = vadd.f32 %v1637, %v1669
  %v1702 = vadd.f32 %v1638, %v1670
  %v1703 = vadd.f32 %v1639, %v1671
  %v1704 = vpack.c.bf16 %v1672, %v1672
  %v1705 = vpack.c.bf16 %v1673, %v1673
  %v1706 = vpack.c.bf16 %v1674, %v1674
  %v1707 = vpack.c.bf16 %v1675, %v1675
  %v1708 = vpack.c.bf16 %v1676, %v1676
  %v1709 = vpack.c.bf16 %v1677, %v1677
  %v1710 = vpack.c.bf16 %v1678, %v1678
  %v1711 = vpack.c.bf16 %v1679, %v1679
  %v1712 = vpack.c.bf16 %v1680, %v1680
  %v1713 = vpack.c.bf16 %v1681, %v1681
  %v1714 = vpack.c.bf16 %v1682, %v1682
  %v1715 = vpack.c.bf16 %v1683, %v1683
  %v1716 = vpack.c.bf16 %v1684, %v1684
  %v1717 = vpack.c.bf16 %v1685, %v1685
  %v1718 = vpack.c.bf16 %v1686, %v1686
  %v1719 = vpack.c.bf16 %v1687, %v1687
  %v1720 = vpack.c.bf16 %v1688, %v1688
  %v1721 = vpack.c.bf16 %v1689, %v1689
  %v1722 = vpack.c.bf16 %v1690, %v1690
  %v1723 = vpack.c.bf16 %v1691, %v1691
  %v1724 = vpack.c.bf16 %v1692, %v1692
  %v1725 = vpack.c.bf16 %v1693, %v1693
  %v1726 = vpack.c.bf16 %v1694, %v1694
  %v1727 = vpack.c.bf16 %v1695, %v1695
  %v1728 = vpack.c.bf16 %v1696, %v1696
  %v1729 = vpack.c.bf16 %v1697, %v1697
  %v1730 = vpack.c.bf16 %v1698, %v1698
  %v1731 = vpack.c.bf16 %v1699, %v1699
  %v1732 = vpack.c.bf16 %v1700, %v1700
  %v1733 = vpack.c.bf16 %v1701, %v1701
  %v1734 = vpack.c.bf16 %v1702, %v1702
  %v1735 = vpack.c.bf16 %v1703, %v1703
  %v1736 = vunpack.c.l.bf16 %v1704
  %v1737 = vunpack.c.l.bf16 %v1705
  %v1738 = vunpack.c.l.bf16 %v1706
  %v1739 = vunpack.c.l.bf16 %v1707
  %v1740 = vunpack.c.l.bf16 %v1708
  %v1741 = vunpack.c.l.bf16 %v1709
  %v1742 = vunpack.c.l.bf16 %v1710
  %v1743 = vunpack.c.l.bf16 %v1711
  %v1744 = vunpack.c.l.bf16 %v1712
  %v1745 = vunpack.c.l.bf16 %v1713
  %v1746 = vunpack.c.l.bf16 %v1714
  %v1747 = vunpack.c.l.bf16 %v1715
  %v1748 = vunpack.c.l.bf16 %v1716
  %v1749 = vunpack.c.l.bf16 %v1717
  %v1750 = vunpack.c.l.bf16 %v1718
  %v1751 = vunpack.c.l.bf16 %v1719
  %v1752 = vunpack.c.l.bf16 %v1720
  %v1753 = vunpack.c.l.bf16 %v1721
  %v1754 = vunpack.c.l.bf16 %v1722
  %v1755 = vunpack.c.l.bf16 %v1723
  %v1756 = vunpack.c.l.bf16 %v1724
  %v1757 = vunpack.c.l.bf16 %v1725
  %v1758 = vunpack.c.l.bf16 %v1726
  %v1759 = vunpack.c.l.bf16 %v1727
  %v1760 = vunpack.c.l.bf16 %v1728
  %v1761 = vunpack.c.l.bf16 %v1729
  %v1762 = vunpack.c.l.bf16 %v1730
  %v1763 = vunpack.c.l.bf16 %v1731
  %v1764 = vunpack.c.l.bf16 %v1732
  %v1765 = vunpack.c.l.bf16 %v1733
  %v1766 = vunpack.c.l.bf16 %v1734
  %v1767 = vunpack.c.l.bf16 %v1735
  %v1768 = vmax.f32 %v1736, 0.0
  %v1769 = vmax.f32 %v1737, 0.0
  %v1770 = vmax.f32 %v1738, 0.0
  %v1771 = vmax.f32 %v1739, 0.0
  %v1772 = vmax.f32 %v1740, 0.0
  %v1773 = vmax.f32 %v1741, 0.0
  %v1774 = vmax.f32 %v1742, 0.0
  %v1775 = vmax.f32 %v1743, 0.0
  %v1776 = vmax.f32 %v1744, 0.0
  %v1777 = vmax.f32 %v1745, 0.0
  %v1778 = vmax.f32 %v1746, 0.0
  %v1779 = vmax.f32 %v1747, 0.0
  %v1780 = vmax.f32 %v1748, 0.0
  %v1781 = vmax.f32 %v1749, 0.0
  %v1782 = vmax.f32 %v1750, 0.0
  %v1783 = vmax.f32 %v1751, 0.0
  %v1784 = vmax.f32 %v1752, 0.0
  %v1785 = vmax.f32 %v1753, 0.0
  %v1786 = vmax.f32 %v1754, 0.0
  %v1787 = vmax.f32 %v1755, 0.0
  %v1788 = vmax.f32 %v1756, 0.0
  %v1789 = vmax.f32 %v1757, 0.0
  %v1790 = vmax.f32 %v1758, 0.0
  %v1791 = vmax.f32 %v1759, 0.0
  %v1792 = vmax.f32 %v1760, 0.0
  %v1793 = vmax.f32 %v1761, 0.0
  %v1794 = vmax.f32 %v1762, 0.0
  %v1795 = vmax.f32 %v1763, 0.0
  %v1796 = vmax.f32 %v1764, 0.0
  %v1797 = vmax.f32 %v1765, 0.0
  %v1798 = vmax.f32 %v1766, 0.0
  %v1799 = vmax.f32 %v1767, 0.0
  %v1800 = vpack.c.bf16 %v1769, %v1768
  %v1801 = vpack.c.bf16 %v1771, %v1770
  %v1802 = vpack.c.bf16 %v1773, %v1772
  %v1803 = vpack.c.bf16 %v1775, %v1774
  %v1804 = vpack.c.bf16 %v1777, %v1776
  %v1805 = vpack.c.bf16 %v1779, %v1778
  %v1806 = vpack.c.bf16 %v1781, %v1780
  %v1807 = vpack.c.bf16 %v1783, %v1782
  %v1808 = vpack.c.bf16 %v1785, %v1784
  %v1809 = vpack.c.bf16 %v1787, %v1786
  %v1810 = vpack.c.bf16 %v1789, %v1788
  %v1811 = vpack.c.bf16 %v1791, %v1790
  %v1812 = vpack.c.bf16 %v1793, %v1792
  %v1813 = vpack.c.bf16 %v1795, %v1794
  %v1814 = vpack.c.bf16 %v1797, %v1796
  %v1815 = vpack.c.bf16 %v1799, %v1798
  %v1816 = vld [vmem:[%s5] sm:$0x3]
  %v1817 = vld [vmem:[#allocation2] sm:$0x1]
  %1819 = vset.pattern.permute.xlu0 0
  %1820 = vperm.xlu0 %1819, %v1817
  %v1821 = vpop.permute.xlu0 %1820
  %v1823 = vperm.slane %v1821, 0
  %1825 = vst [vmem:[#allocation1] ss:$9 sm:$0xff] %v1816
  %v1826 = vld [vmem:[#allocation1] sm:$0xff]
  %v1827 = vld [vmem:[#allocation1 + $0x9] sm:$0xff]
  %1830 = vmatpush.bf16.msra.mxu0 %v1807
  %1831 = vmatpush.bf16.msra.mxu0 %v1806
  %1832 = vmatpush.bf16.msra.mxu0 %v1805
  %1833 = vmatpush.bf16.msra.mxu0 %v1804
  %1834 = vmatpush.bf16.msra.mxu0 %v1803
  %1835 = vmatpush.bf16.msra.mxu0 %v1802
  %1836 = vmatpush.bf16.msra.mxu0 %v1801
  %1837 = vmatpush.bf16.msra.mxu0 %v1800
  %1838 = vmatmul.bf16.gmra.mxu0 %v1826
  %v1839 = vpop.f32.mrf.mxu0
  %v1840 = vadd.f32 %v1823, %v1839
  %v1841 = vpop.f32.mrf.mxu0
  %1842 = vdwg.mxu0
  %1843 = vmatpush.bf16.msra.mxu0 %v1815
  %1844 = vmatpush.bf16.msra.mxu0 %v1814
  %1845 = vmatpush.bf16.msra.mxu0 %v1813
  %1846 = vmatpush.bf16.msra.mxu0 %v1812
  %1847 = vmatpush.bf16.msra.mxu0 %v1811
  %1848 = vmatpush.bf16.msra.mxu0 %v1810
  %1849 = vmatpush.bf16.msra.mxu0 %v1809
  %1850 = vmatpush.bf16.msra.mxu0 %v1808
  %1851 = vmatmul.bf16.gmra.mxu0 %v1827
  %v1852 = vpop.f32.mrf.mxu0
  %v1853 = vadd.f32 %v1840, %v1852
  %v1854 = vpop.f32.mrf.mxu0
  %1855 = vdwg.mxu0
  %1856 = vst [vmem:[%s7] sm:$0x1] %v1853
  // Predicated region
  $region30: #{critic_forward.1} parent=0 // pred_check
    _
  $region31: #{critic_forward.1} parent=0 // pred_check_branch
    %1858 = sbr.rel (0) target = $region33
  $region32: #{critic_forward.1} parent=0 // pred_region
    _
  $region33: #{critic_forward.1} parent=0 // pred_fallthru
    _
  // Predicated region
  $region34: #{critic_forward.1} parent=0 // pred_check
    _
  $region35: #{critic_forward.1} parent=0 // pred_check_branch
    %1860 = sbr.rel (0) target = $region37
  $region36: #{critic_forward.1} parent=0 // pred_region
    _
  $region37: #{critic_forward.1} parent=0 // pred_fallthru
    _

</llo_original>
